<compile_context>
chip_gen: v5e
topology: v5e:2x2
jax: 0.10.0
libtpu: 0.0.40
codegen_flags: <defaults>
</compile_context>

<pallas_src>
import functools

import jax
import jax.numpy as jnp
import numpy as np
from jax import lax
from jax.experimental import pallas as pl
from jax.experimental.pallas import tpu as pltpu


def _round_up(x, m):
    return ((x + m - 1) // m) * m


def _vmem_capacity_bytes():
    try:
        info = pltpu.get_tpu_info()
        cap = int(getattr(info, "vmem_capacity_bytes", 0) or 0)
        if cap > 0:
            return cap
    except Exception:
        pass
    return 64 * 1024 * 1024   # conservative default (v7x per-core VMEM)


# ------------------------------ Pallas kernels ------------------------------

def _fused_mlp_kernel(xa_ref, xb_ref, wa_ref, wb_ref, b_ref, ws0_ref, wsb_ref,
                      m_ref, u_ref, xw_ref, sr_ref, ll_ref, g_ref,
                      *, ds_pad, dl_pad, dlp_pad):
    """Per (batch, row-tile): fused 4-MLP + span-left precontraction + label prep."""
    xa = xa_ref[0]                               # (tr, H/2) compute dtype
    xb = xb_ref[0]
    h = jnp.dot(xa, wa_ref[...], preferred_element_type=jnp.float32)
    h = h + jnp.dot(xb, wb_ref[...], preferred_element_type=jnp.float32)
    h = h + b_ref[...]
    # LeakyReLU(negative_slope=0.1); the constant-1 column (bias=1, weight=0) stays 1.
    f = jnp.where(h >= 0.0, h, 0.1 * h).astype(xw_ref.dtype)

    # All column offsets are multiples of 128 -> free tile selections.
    span_l = f[:, :ds_pad]
    sr_ref[0] = f[:, ds_pad:2 * ds_pad]
    label_r = f[:, 2 * ds_pad:2 * ds_pad + dl_pad]
    ll_ref[0] = f[:, 2 * ds_pad + dl_pad:2 * ds_pad + dl_pad + dlp_pad]

    # xw = [span_l, 1] @ W_span (bias_x row folded into wsb); hoisted out of the
    # (j, i) score loop -> computed exactly once per row.
    xw = jnp.dot(span_l, ws0_ref[...], preferred_element_type=jnp.float32) + wsb_ref[...]
    xw_ref[0] = xw.astype(xw_ref.dtype)

    # g[y, l*Dlp_pad + d'] = sum_e W_label[l, d', e] * label_r[y, e] + W_label[l, d', Dl]
    g = jnp.dot(label_r, m_ref[...], preferred_element_type=jnp.float32) + u_ref[...]
    g_ref[0] = g.astype(g_ref.dtype)


def _scores_kernel(xw_ref, sr_ref, ll_ref, g_ref, span_ref, label_ref):
    # Span biaffine: xw (ti, Ds_pad) · span_r (tj, Ds_pad)^T — transposed operand
    # consumed via dot_general, bias already folded into xw.
    span_ref[0] = lax.dot_general(xw_ref[0], sr_ref[0], (((1,), (1,)), ((), ())),
                                  preferred_element_type=jnp.float32)
    # Label biaffine, all labels fused; output columns already ordered
    # (right-position, label) -> final layout, no transpose anywhere.
    label_ref[0] = lax.dot_general(ll_ref[0], g_ref[0], (((1,), (1,)), ((), ())),
                                   preferred_element_type=jnp.float32)


# ------------------------------ model wrapper --------------------------------

def init_params(key, n_hidden, n_mlp_span, n_mlp_label, n_labels):
    ks = jax.random.split(key, 6)

    def lin(k, fan_in, fan_out):
        scale = 1.0 / np.sqrt(fan_in)
        return jax.random.normal(k, (fan_in, fan_out), jnp.float32) * scale

    params = {
        "w_span_l": lin(ks[0], n_hidden, n_mlp_span),
        "b_span_l": jnp.zeros((1, n_mlp_span), jnp.float32),
        "w_span_r": lin(ks[1], n_hidden, n_mlp_span),
        "b_span_r": jnp.zeros((1, n_mlp_span), jnp.float32),
        "w_label_l": lin(ks[2], n_hidden, n_mlp_label),
        "b_label_l": jnp.zeros((1, n_mlp_label), jnp.float32),
        "w_label_r": lin(ks[3], n_hidden, n_mlp_label),
        "b_label_r": jnp.zeros((1, n_mlp_label), jnp.float32),
        # Biaffine(n_in=n_mlp_span, n_out=1, bias_x=True, bias_y=False):
        #   weight (n_out, n_in + 1, n_in)
        "w_span_attn": jax.random.normal(
            ks[4], (1, n_mlp_span + 1, n_mlp_span), jnp.float32) * 0.02,
        # Biaffine(n_in=n_mlp_label, n_out=n_labels, bias_x=True, bias_y=True):
        #   weight (n_out, n_in + 1, n_in + 1)
        "w_label_attn": jax.random.normal(
            ks[5], (n_labels, n_mlp_label + 1, n_mlp_label + 1), jnp.float32) * 0.02,
    }
    return params


def crf_constituency_forward(x, params, *, compute_dtype=jnp.bfloat16):
    """Forward pass of CRFConstituencyDecoder.

    x: [B, S, H] encoder hidden states (H even).
    Returns (s_span [B, S-1, S-1], s_label [B, S-1, S-1, n_labels]), both float32.
    """
    B, S, H = x.shape
    assert H % 2 == 0
    half = H // 2
    Sp = S - 1
    f32 = jnp.float32
    cdt = jnp.dtype(compute_dtype)
    cb = cdt.itemsize

    w_sl, w_sr = params["w_span_l"], params["w_span_r"]
    w_ll, w_lr = params["w_label_l"], params["w_label_r"]
    Ws = params["w_span_attn"]             # (1, Ds+1, Ds)
    Wl = params["w_label_attn"]            # (L, Dl+1, Dl+1)
    Ds = w_sl.shape[1]
    Dl = w_ll.shape[1]
    L = Wl.shape[0]
    Dlp = Dl + 1

    Ds_pad = _round_up(Ds, 128)
    Dl_pad = _round_up(Dl, 128)
    Dlp_pad = _round_up(Dlp, 128)
    Dtot_pad = 2 * Ds_pad + Dl_pad + Dlp_pad
    GL = L * Dlp_pad                        # merged label-weight lane width

    # ---- tiny weight preprocessing (XLA, negligible vs activations) ----
    def padc(a, w):
        return jnp.pad(a, ((0, 0), (0, w - a.shape[1])))

    # Fused MLP weight/bias; 128-aligned segments: span_l | span_r | label_r | label_l,1
    w_fused = jnp.concatenate(
        [padc(w_sl, Ds_pad), padc(w_sr, Ds_pad), padc(w_lr, Dl_pad),
         padc(w_ll, Dlp_pad)], axis=1)                               # (H, Dtot_pad)
    b_fused = jnp.concatenate(
        [padc(params["b_span_l"], Ds_pad), padc(params["b_span_r"], Ds_pad),
         padc(params["b_label_r"], Dl_pad),
         padc(jnp.concatenate([params["b_label_l"], jnp.ones((1, 1), f32)], 1),
              Dlp_pad)], axis=1)                                     # (1, Dtot_pad) f32
    wa = w_fused[:half].astype(cdt)
    wb = w_fused[half:].astype(cdt)

    # Span biaffine split into main weight + bias_x row (zero-padded to 128-mult).
    w_span0 = jnp.pad(Ws[0, :Ds, :], ((0, Ds_pad - Ds), (0, Ds_pad - Ds))).astype(cdt)
    w_span_b = jnp.pad(Ws[0, Ds, :][None, :], ((0, 0), (0, Ds_pad - Ds)))  # f32

    # Label biaffine merged over all labels:
    #   m_aug[e, l*Dlp_pad + d'] = Wl[l, d', e];  u_aug[0, l*Dlp_pad + d'] = Wl[l, d', Dl]
    m = jnp.transpose(Wl[:, :, :Dl], (2, 0, 1))                      # (Dl, L, Dlp)
    m = jnp.pad(m, ((0, Dl_pad - Dl), (0, 0), (0, Dlp_pad - Dlp)))
    m_aug = m.reshape(Dl_pad, GL).astype(cdt)
    u_aug = jnp.pad(Wl[:, :, Dl], ((0, 0), (0, Dlp_pad - Dlp))).reshape(1, GL)  # f32

    # Chunk + shift done in the wrapper (cheap XLA slice + cast); the kernel never
    # sees a sublane-offset-1 slice.
    xa = x[:, :Sp, :half].astype(cdt)
    xb = x[:, 1:, half:].astype(cdt)

    # ---- VMEM-aware tile selection + explicit scoped-VMEM limits ----
    cap = _vmem_capacity_bytes()
    budget = (cap * 3) // 4

    def k1_bytes(tr):
        io = 2 * 2 * tr * half * cb
        wts = 2 * ((2 * half * Dtot_pad + Ds_pad * Ds_pad + Dl_pad * GL) * cb
                   + (Dtot_pad + Ds_pad + GL) * 4)
        outs = 2 * tr * (2 * Ds_pad + Dlp_pad + GL) * cb
        tmp = tr * (Dtot_pad + GL) * 4          # f32 accumulators before the cast
        return io + wts + outs + tmp

    def k3_bytes(ti, tj):
        ins = 2 * (ti * Ds_pad + tj * Ds_pad + ti * Dlp_pad + tj * GL) * cb
        outs = 2 * (ti * tj + ti * tj * L) * 4
        return ins + outs

    def pick_row_tile(fp):
        if Sp <= 256:
            cands = [Sp] + [t for t in (128, 64, 32, 16, 8) if t < Sp]
        else:
            cands = [256, 128, 64, 32, 16, 8]
        for t in cands:
            if fp(t) <= budget:
                return t
        return cands[-1]

    def pick_score_tiles():
        if Sp <= 256:
            cands = [(Sp, Sp)] + [(t, Sp) for t in (128, 64, 32, 16, 8) if t < Sp]
        else:
            # tj stays a multiple of 128 (lane-dense output blocks); 256 preferred
            # for the v6e/v7x 256-wide MXU where VMEM allows.
            cands = [(256, 256), (128, 256), (256, 128), (128, 128),
                     (64, 128), (32, 128), (16, 128), (8, 128)]
        for ti, tj in cands:
            if k3_bytes(ti, tj) <= budget:
                return ti, tj
        # TODO(synk): for very large label sets, add an extra grid axis over L
        # instead of shrinking the row tiles further.
        return cands[-1]

    tr = pick_row_tile(k1_bytes)
    ti, tj = pick_score_tiles()
    nr = pl.cdiv(Sp, tr)
    ni = pl.cdiv(Sp, ti)
    nj = pl.cdiv(Sp, tj)

    def vlimit(fp_bytes):
        return int(min((cap * 9) // 10, max(32 << 20, fp_bytes + (8 << 20))))

    # ---- kernel 1: chunk/shift + four MLPs + xw + label prep, row-tiled ----
    kernel1 = functools.partial(_fused_mlp_kernel, ds_pad=Ds_pad, dl_pad=Dl_pad,
                                dlp_pad=Dlp_pad)
    xw_all, span_r_all, label_l_all, g_all = pl.pallas_call(
        kernel1,
        out_shape=(jax.ShapeDtypeStruct((B, Sp, Ds_pad), cdt),
                   jax.ShapeDtypeStruct((B, Sp, Ds_pad), cdt),
                   jax.ShapeDtypeStruct((B, Sp, Dlp_pad), cdt),
                   jax.ShapeDtypeStruct((B, Sp, GL), cdt)),
        grid=(B, nr),
        in_specs=[
            pl.BlockSpec((1, tr, half), lambda b, r: (b, r, 0)),
            pl.BlockSpec((1, tr, half), lambda b, r: (b, r, 0)),
            pl.BlockSpec((half, Dtot_pad), lambda b, r: (0, 0)),
            pl.BlockSpec((half, Dtot_pad), lambda b, r: (0, 0)),
            pl.BlockSpec((1, Dtot_pad), lambda b, r: (0, 0)),
            pl.BlockSpec((Ds_pad, Ds_pad), lambda b, r: (0, 0)),
            pl.BlockSpec((1, Ds_pad), lambda b, r: (0, 0)),
            pl.BlockSpec((Dl_pad, GL), lambda b, r: (0, 0)),
            pl.BlockSpec((1, GL), lambda b, r: (0, 0)),
        ],
        out_specs=(pl.BlockSpec((1, tr, Ds_pad), lambda b, r: (b, r, 0)),
                   pl.BlockSpec((1, tr, Ds_pad), lambda b, r: (b, r, 0)),
                   pl.BlockSpec((1, tr, Dlp_pad), lambda b, r: (b, r, 0)),
                   pl.BlockSpec((1, tr, GL), lambda b, r: (b, r, 0))),
        compiler_params=pltpu.CompilerParams(
            dimension_semantics=("parallel", "parallel"),
            vmem_limit_bytes=vlimit(k1_bytes(tr))),
    )(xa, xb, wa, wb, b_fused, w_span0, w_span_b, m_aug, u_aug)

    # Free, layout-preserving HBM view: rows become (right-position, label) pairs.
    g_flat = g_all.reshape(B, Sp * L, Dlp_pad)

    # ---- kernel 2: span + label scores, tiled over (left rows, right rows) ----
    s_span, s_label_flat = pl.pallas_call(
        _scores_kernel,
        out_shape=(jax.ShapeDtypeStruct((B, Sp, Sp), f32),
                   jax.ShapeDtypeStruct((B, Sp, Sp * L), f32)),
        grid=(B, nj, ni),            # i innermost: per-j operands are not re-fetched
        in_specs=[
            pl.BlockSpec((1, ti, Ds_pad), lambda b, j, i: (b, i, 0)),
            pl.BlockSpec((1, tj, Ds_pad), lambda b, j, i: (b, j, 0)),
            pl.BlockSpec((1, ti, Dlp_pad), lambda b, j, i: (b, i, 0)),
            pl.BlockSpec((1, tj * L, Dlp_pad), lambda b, j, i: (b, j, 0)),
        ],
        out_specs=(pl.BlockSpec((1, ti, tj), lambda b, j, i: (b, i, j)),
                   pl.BlockSpec((1, ti, tj * L), lambda b, j, i: (b, i, j))),
        compiler_params=pltpu.CompilerParams(
            dimension_semantics=("parallel", "parallel", "parallel"),
            vmem_limit_bytes=vlimit(k3_bytes(ti, tj))),
    )(xw_all, span_r_all, label_l_all, g_flat)

    # Free reshape (splits the minor dim): final [B, Sp, Sp, L] layout, no transpose.
    s_label = s_label_flat.reshape(B, Sp, Sp, L)
    return s_span, s_label


# ------------------------ pure-JAX reference (f32) ---------------------------

def _reference_forward(x, params):
    B, S, H = x.shape
    half = H // 2
    xc = jnp.concatenate([x[..., :half][:, :-1], x[..., half:][:, 1:]], axis=-1)

    def ref_mlp(v, w, b):
        h = v @ w + b
        return jnp.where(h >= 0, h, 0.1 * h)

    span_l = ref_mlp(xc, params["w_span_l"], params["b_span_l"])
    span_r = ref_mlp(xc, params["w_span_r"], params["b_span_r"])
    label_l = ref_mlp(xc, params["w_label_l"], params["b_label_l"])
    label_r = ref_mlp(xc, params["w_label_r"], params["b_label_r"])

    ones = jnp.ones(span_l.shape[:-1] + (1,), jnp.float32)
    span_l_aug = jnp.concatenate([span_l, ones], -1)
    s_span = jnp.einsum("bxi,oij,byj->boxy", span_l_aug,
                        params["w_span_attn"], span_r)[:, 0]
    label_l_aug = jnp.concatenate([label_l, ones], -1)
    label_r_aug = jnp.concatenate([label_r, ones], -1)
    s_label = jnp.einsum("bxi,oij,byj->boxy", label_l_aug,
                         params["w_label_attn"], label_r_aug)
    s_label = jnp.transpose(s_label, (0, 2, 3, 1))
    return s_span, s_label


if __name__ == "__main__":
    # Small deterministic config.
    B, S, H = 2, 8, 32            # batch, seq_len, n_hidden (even)
    n_mlp_span, n_mlp_label = 64, 32
    n_labels = 8

    key = jax.random.PRNGKey(0)
    kx, kp = jax.random.split(key)
    x = jax.random.normal(kx, (B, S, H), jnp.float32)
    params = init_params(kp, H, n_mlp_span, n_mlp_label, n_labels)

    ref_span, ref_label = _reference_forward(x, params)

    # f32 MXU path: bit-faithful to the module, tight tolerance.
    fwd_f32 = jax.jit(functools.partial(crf_constituency_forward,
                                        compute_dtype=jnp.float32))
    s_span32, s_label32 = fwd_f32(x, params)
    jax.block_until_ready((s_span32, s_label32))
    assert s_span32.shape == (B, S - 1, S - 1)
    assert s_label32.shape == (B, S - 1, S - 1, n_labels)
    np.testing.assert_allclose(np.asarray(s_span32), np.asarray(ref_span),
                               rtol=2e-3, atol=2e-3)
    np.testing.assert_allclose(np.asarray(s_label32), np.asarray(ref_label),
                               rtol=2e-3, atol=2e-3)

    # Default bf16 MXU path (f32 accumulation): looser tolerance for bf16 inputs.
    fwd_bf16 = jax.jit(crf_constituency_forward)
    s_span16, s_label16 = fwd_bf16(x, params)
    jax.block_until_ready((s_span16, s_label16))
    assert s_span16.shape == (B, S - 1, S - 1)
    assert s_label16.shape == (B, S - 1, S - 1, n_labels)
    np.testing.assert_allclose(np.asarray(s_span16), np.asarray(ref_span),
                               rtol=2e-2, atol=2e-2)
    np.testing.assert_allclose(np.asarray(s_label16), np.asarray(ref_label),
                               rtol=2e-2, atol=2e-2)

    print("KERNEL_OK")
</pallas_src>

<mosaic_0001>
module attributes {stable_mosaic.version = 11 : i64} {
  func.func @_fused_mlp_kernel(%arg0: i32, %arg1: i32, %arg2: memref<1x7x16xf32, #tpu.memory_space<vmem>>, %arg3: memref<1x7x16xf32, #tpu.memory_space<vmem>>, %arg4: memref<16x512xf32, #tpu.memory_space<vmem>>, %arg5: memref<16x512xf32, #tpu.memory_space<vmem>>, %arg6: memref<1x512xf32, #tpu.memory_space<vmem>>, %arg7: memref<128x128xf32, #tpu.memory_space<vmem>>, %arg8: memref<1x128xf32, #tpu.memory_space<vmem>>, %arg9: memref<128x1024xf32, #tpu.memory_space<vmem>>, %arg10: memref<1x1024xf32, #tpu.memory_space<vmem>>, %arg11: memref<1x7x128xf32, #tpu.memory_space<vmem>>, %arg12: memref<1x7x128xf32, #tpu.memory_space<vmem>>, %arg13: memref<1x7x128xf32, #tpu.memory_space<vmem>>, %arg14: memref<1x7x1024xf32, #tpu.memory_space<vmem>>) attributes {dimension_semantics = [#tpu.dimension_semantics<parallel>, #tpu.dimension_semantics<parallel>], iteration_bounds = array<i64: 2, 1>, scalar_prefetch = 0 : i64, scratch_operands = 0 : i64, tpu.core_type = #tpu.core_type<tc>, window_params = [{transform_indices = @transform_0, window_bounds = array<i64: 1, 7, 16>}, {transform_indices = @transform_1, window_bounds = array<i64: 1, 7, 16>}, {pipeline_mode = #tpu.pipeline_mode<synchronous>, transform_indices = @transform_2, window_bounds = array<i64: 16, 512>}, {pipeline_mode = #tpu.pipeline_mode<synchronous>, transform_indices = @transform_3, window_bounds = array<i64: 16, 512>}, {pipeline_mode = #tpu.pipeline_mode<synchronous>, transform_indices = @transform_4, window_bounds = array<i64: 1, 512>}, {pipeline_mode = #tpu.pipeline_mode<synchronous>, transform_indices = @transform_5, window_bounds = array<i64: 128, 128>}, {pipeline_mode = #tpu.pipeline_mode<synchronous>, transform_indices = @transform_6, window_bounds = array<i64: 1, 128>}, {pipeline_mode = #tpu.pipeline_mode<synchronous>, transform_indices = @transform_7, window_bounds = array<i64: 128, 1024>}, {pipeline_mode = #tpu.pipeline_mode<synchronous>, transform_indices = @transform_8, window_bounds = array<i64: 1, 1024>}, {transform_indices = @transform_9, window_bounds = array<i64: 1, 7, 128>}, {transform_indices = @transform_10, window_bounds = array<i64: 1, 7, 128>}, {transform_indices = @transform_11, window_bounds = array<i64: 1, 7, 128>}, {transform_indices = @transform_12, window_bounds = array<i64: 1, 7, 1024>}]} {
    %c0 = arith.constant 0 : index
    %c0_0 = arith.constant 0 : index
    %c0_1 = arith.constant 0 : index
    %0 = vector.load %arg2[%c0, %c0_0, %c0_1] : memref<1x7x16xf32, #tpu.memory_space<vmem>>, vector<1x7x16xf32>
    %1 = vector.shape_cast %0 : vector<1x7x16xf32> to vector<7x16xf32>
    %c0_2 = arith.constant 0 : index
    %c0_3 = arith.constant 0 : index
    %c0_4 = arith.constant 0 : index
    %2 = vector.load %arg3[%c0_2, %c0_3, %c0_4] : memref<1x7x16xf32, #tpu.memory_space<vmem>>, vector<1x7x16xf32>
    %3 = vector.shape_cast %2 : vector<1x7x16xf32> to vector<7x16xf32>
    %c0_5 = arith.constant 0 : index
    %c0_6 = arith.constant 0 : index
    %4 = vector.load %arg4[%c0_5, %c0_6] : memref<16x512xf32, #tpu.memory_space<vmem>>, vector<16x512xf32>
    %cst = arith.constant dense<0.000000e+00> : vector<7x512xf32>
    %5 = tpu.matmul %1, %4, %cst {dimension_numbers = #tpu.dot_dimension_numbers<[1], [0], [0], [1], [0, 0, 1, 1], [], []>} : vector<7x16xf32>, vector<16x512xf32>, vector<7x512xf32> -> vector<7x512xf32>
    %c0_7 = arith.constant 0 : index
    %c0_8 = arith.constant 0 : index
    %6 = vector.load %arg5[%c0_7, %c0_8] : memref<16x512xf32, #tpu.memory_space<vmem>>, vector<16x512xf32>
    %cst_9 = arith.constant dense<0.000000e+00> : vector<7x512xf32>
    %7 = tpu.matmul %3, %6, %cst_9 {dimension_numbers = #tpu.dot_dimension_numbers<[1], [0], [0], [1], [0, 0, 1, 1], [], []>} : vector<7x16xf32>, vector<16x512xf32>, vector<7x512xf32> -> vector<7x512xf32>
    %8 = arith.addf %5, %7 : vector<7x512xf32>
    %c0_10 = arith.constant 0 : index
    %c0_11 = arith.constant 0 : index
    %9 = vector.load %arg6[%c0_10, %c0_11] : memref<1x512xf32, #tpu.memory_space<vmem>>, vector<1x512xf32>
    %10 = vector.broadcast %9 : vector<1x512xf32> to vector<7x512xf32>
    %11 = arith.addf %8, %10 : vector<7x512xf32>
    %cst_12 = arith.constant 0.000000e+00 : f32
    %12 = vector.broadcast %cst_12 : f32 to vector<7x512xf32>
    %13 = arith.cmpf oge, %11, %12 : vector<7x512xf32>
    %cst_13 = arith.constant 1.000000e-01 : f32
    %14 = vector.broadcast %cst_13 : f32 to vector<7x512xf32>
    %15 = arith.mulf %14, %11 : vector<7x512xf32>
    %16 = arith.select %13, %11, %15 : vector<7x512xi1>, vector<7x512xf32>
    %17 = vector.extract_strided_slice %16 {offsets = [0, 0], sizes = [7, 128], strides = [1, 1]} : vector<7x512xf32> to vector<7x128xf32>
    %18 = vector.extract_strided_slice %16 {offsets = [0, 128], sizes = [7, 128], strides = [1, 1]} : vector<7x512xf32> to vector<7x128xf32>
    %c0_14 = arith.constant 0 : index
    %c0_15 = arith.constant 0 : index
    %c0_16 = arith.constant 0 : index
    %19 = vector.load %arg12[%c0_14, %c0_15, %c0_16] : memref<1x7x128xf32, #tpu.memory_space<vmem>>, vector<1x7x128xf32>
    %20 = vector.shape_cast %19 : vector<1x7x128xf32> to vector<7x128xf32>
    %21 = vector.shape_cast %18 : vector<7x128xf32> to vector<1x7x128xf32>
    tpu.vector_store %arg12[%c0_14, %c0_15, %c0_16], %21 {strides = array<i32>} : memref<1x7x128xf32, #tpu.memory_space<vmem>>, vector<1x7x128xf32>,
    %22 = vector.extract_strided_slice %16 {offsets = [0, 256], sizes = [7, 128], strides = [1, 1]} : vector<7x512xf32> to vector<7x128xf32>
    %23 = vector.extract_strided_slice %16 {offsets = [0, 384], sizes = [7, 128], strides = [1, 1]} : vector<7x512xf32> to vector<7x128xf32>
    %c0_17 = arith.constant 0 : index
    %c0_18 = arith.constant 0 : index
    %c0_19 = arith.constant 0 : index
    %24 = vector.load %arg13[%c0_17, %c0_18, %c0_19] : memref<1x7x128xf32, #tpu.memory_space<vmem>>, vector<1x7x128xf32>
    %25 = vector.shape_cast %24 : vector<1x7x128xf32> to vector<7x128xf32>
    %26 = vector.shape_cast %23 : vector<7x128xf32> to vector<1x7x128xf32>
    tpu.vector_store %arg13[%c0_17, %c0_18, %c0_19], %26 {strides = array<i32>} : memref<1x7x128xf32, #tpu.memory_space<vmem>>, vector<1x7x128xf32>,
    %c0_20 = arith.constant 0 : index
    %c0_21 = arith.constant 0 : index
    %27 = vector.load %arg7[%c0_20, %c0_21] : memref<128x128xf32, #tpu.memory_space<vmem>>, vector<128x128xf32>
    %cst_22 = arith.constant dense<0.000000e+00> : vector<7x128xf32>
    %28 = tpu.matmul %17, %27, %cst_22 {dimension_numbers = #tpu.dot_dimension_numbers<[1], [0], [0], [1], [0, 0, 1, 1], [], []>} : vector<7x128xf32>, vector<128x128xf32>, vector<7x128xf32> -> vector<7x128xf32>
    %c0_23 = arith.constant 0 : index
    %c0_24 = arith.constant 0 : index
    %29 = vector.load %arg8[%c0_23, %c0_24] : memref<1x128xf32, #tpu.memory_space<vmem>>, vector<1x128xf32>
    %30 = vector.broadcast %29 : vector<1x128xf32> to vector<7x128xf32>
    %31 = arith.addf %28, %30 : vector<7x128xf32>
    %c0_25 = arith.constant 0 : index
    %c0_26 = arith.constant 0 : index
    %c0_27 = arith.constant 0 : index
    %32 = vector.load %arg11[%c0_25, %c0_26, %c0_27] : memref<1x7x128xf32, #tpu.memory_space<vmem>>, vector<1x7x128xf32>
    %33 = vector.shape_cast %32 : vector<1x7x128xf32> to vector<7x128xf32>
    %34 = vector.shape_cast %31 : vector<7x128xf32> to vector<1x7x128xf32>
    tpu.vector_store %arg11[%c0_25, %c0_26, %c0_27], %34 {strides = array<i32>} : memref<1x7x128xf32, #tpu.memory_space<vmem>>, vector<1x7x128xf32>,
    %c0_28 = arith.constant 0 : index
    %c0_29 = arith.constant 0 : index
    %35 = vector.load %arg9[%c0_28, %c0_29] : memref<128x1024xf32, #tpu.memory_space<vmem>>, vector<128x1024xf32>
    %cst_30 = arith.constant dense<0.000000e+00> : vector<7x1024xf32>
    %36 = tpu.matmul %22, %35, %cst_30 {dimension_numbers = #tpu.dot_dimension_numbers<[1], [0], [0], [1], [0, 0, 1, 1], [], []>} : vector<7x128xf32>, vector<128x1024xf32>, vector<7x1024xf32> -> vector<7x1024xf32>
    %c0_31 = arith.constant 0 : index
    %c0_32 = arith.constant 0 : index
    %37 = vector.load %arg10[%c0_31, %c0_32] : memref<1x1024xf32, #tpu.memory_space<vmem>>, vector<1x1024xf32>
    %38 = vector.broadcast %37 : vector<1x1024xf32> to vector<7x1024xf32>
    %39 = arith.addf %36, %38 : vector<7x1024xf32>
    %c0_33 = arith.constant 0 : index
    %c0_34 = arith.constant 0 : index
    %c0_35 = arith.constant 0 : index
    %40 = vector.load %arg14[%c0_33, %c0_34, %c0_35] : memref<1x7x1024xf32, #tpu.memory_space<vmem>>, vector<1x7x1024xf32>
    %41 = vector.shape_cast %40 : vector<1x7x1024xf32> to vector<7x1024xf32>
    %42 = vector.shape_cast %39 : vector<7x1024xf32> to vector<1x7x1024xf32>
    tpu.vector_store %arg14[%c0_33, %c0_34, %c0_35], %42 {strides = array<i32>} : memref<1x7x1024xf32, #tpu.memory_space<vmem>>, vector<1x7x1024xf32>,
    return
  }
  func.func @transform_0(%arg0: i32, %arg1: i32) -> (i32, i32, i32) {
    %c0_i32 = arith.constant 0 : i32
    %c0_i32_0 = arith.constant 0 : i32
    return %arg0, %arg1, %c0_i32 : i32, i32, i32
  }
  func.func @transform_1(%arg0: i32, %arg1: i32) -> (i32, i32, i32) {
    %c0_i32 = arith.constant 0 : i32
    %c0_i32_0 = arith.constant 0 : i32
    return %arg0, %arg1, %c0_i32 : i32, i32, i32
  }
  func.func @transform_2(%arg0: i32, %arg1: i32) -> (i32, i32) {
    %c0_i32 = arith.constant 0 : i32
    %c0_i32_0 = arith.constant 0 : i32
    %c0_i32_1 = arith.constant 0 : i32
    return %c0_i32, %c0_i32_0 : i32, i32
  }
  func.func @transform_3(%arg0: i32, %arg1: i32) -> (i32, i32) {
    %c0_i32 = arith.constant 0 : i32
    %c0_i32_0 = arith.constant 0 : i32
    %c0_i32_1 = arith.constant 0 : i32
    return %c0_i32, %c0_i32_0 : i32, i32
  }
  func.func @transform_4(%arg0: i32, %arg1: i32) -> (i32, i32) {
    %c0_i32 = arith.constant 0 : i32
    %c0_i32_0 = arith.constant 0 : i32
    %c0_i32_1 = arith.constant 0 : i32
    return %c0_i32, %c0_i32_0 : i32, i32
  }
  func.func @transform_5(%arg0: i32, %arg1: i32) -> (i32, i32) {
    %c0_i32 = arith.constant 0 : i32
    %c0_i32_0 = arith.constant 0 : i32
    %c0_i32_1 = arith.constant 0 : i32
    return %c0_i32, %c0_i32_0 : i32, i32
  }
  func.func @transform_6(%arg0: i32, %arg1: i32) -> (i32, i32) {
    %c0_i32 = arith.constant 0 : i32
    %c0_i32_0 = arith.constant 0 : i32
    %c0_i32_1 = arith.constant 0 : i32
    return %c0_i32, %c0_i32_0 : i32, i32
  }
  func.func @transform_7(%arg0: i32, %arg1: i32) -> (i32, i32) {
    %c0_i32 = arith.constant 0 : i32
    %c0_i32_0 = arith.constant 0 : i32
    %c0_i32_1 = arith.constant 0 : i32
    return %c0_i32, %c0_i32_0 : i32, i32
  }
  func.func @transform_8(%arg0: i32, %arg1: i32) -> (i32, i32) {
    %c0_i32 = arith.constant 0 : i32
    %c0_i32_0 = arith.constant 0 : i32
    %c0_i32_1 = arith.constant 0 : i32
    return %c0_i32, %c0_i32_0 : i32, i32
  }
  func.func @transform_9(%arg0: i32, %arg1: i32) -> (i32, i32, i32) {
    %c0_i32 = arith.constant 0 : i32
    %c0_i32_0 = arith.constant 0 : i32
    return %arg0, %arg1, %c0_i32 : i32, i32, i32
  }
  func.func @transform_10(%arg0: i32, %arg1: i32) -> (i32, i32, i32) {
    %c0_i32 = arith.constant 0 : i32
    %c0_i32_0 = arith.constant 0 : i32
    return %arg0, %arg1, %c0_i32 : i32, i32, i32
  }
  func.func @transform_11(%arg0: i32, %arg1: i32) -> (i32, i32, i32) {
    %c0_i32 = arith.constant 0 : i32
    %c0_i32_0 = arith.constant 0 : i32
    return %arg0, %arg1, %c0_i32 : i32, i32, i32
  }
  func.func @transform_12(%arg0: i32, %arg1: i32) -> (i32, i32, i32) {
    %c0_i32 = arith.constant 0 : i32
    %c0_i32_0 = arith.constant 0 : i32
    return %arg0, %arg1, %c0_i32 : i32, i32, i32
  }
}

module attributes {stable_mosaic.version = 11 : i64} {
  func.func @_scores_kernel(%arg0: i32, %arg1: i32, %arg2: i32, %arg3: memref<1x7x128xf32, #tpu.memory_space<vmem>>, %arg4: memref<1x7x128xf32, #tpu.memory_space<vmem>>, %arg5: memref<1x7x128xf32, #tpu.memory_space<vmem>>, %arg6: memref<1x56x128xf32, #tpu.memory_space<vmem>>, %arg7: memref<1x7x7xf32, #tpu.memory_space<vmem>>, %arg8: memref<1x7x56xf32, #tpu.memory_space<vmem>>) attributes {dimension_semantics = [#tpu.dimension_semantics<parallel>, #tpu.dimension_semantics<parallel>, #tpu.dimension_semantics<parallel>], iteration_bounds = array<i64: 2, 1, 1>, scalar_prefetch = 0 : i64, scratch_operands = 0 : i64, tpu.core_type = #tpu.core_type<tc>, window_params = [{transform_indices = @transform_0, window_bounds = array<i64: 1, 7, 128>}, {transform_indices = @transform_1, window_bounds = array<i64: 1, 7, 128>}, {transform_indices = @transform_2, window_bounds = array<i64: 1, 7, 128>}, {transform_indices = @transform_3, window_bounds = array<i64: 1, 56, 128>}, {transform_indices = @transform_4, window_bounds = array<i64: 1, 7, 7>}, {transform_indices = @transform_5, window_bounds = array<i64: 1, 7, 56>}]} {
    %c0 = arith.constant 0 : index
    %c0_0 = arith.constant 0 : index
    %c0_1 = arith.constant 0 : index
    %0 = vector.load %arg3[%c0, %c0_0, %c0_1] : memref<1x7x128xf32, #tpu.memory_space<vmem>>, vector<1x7x128xf32>
    %1 = vector.shape_cast %0 : vector<1x7x128xf32> to vector<7x128xf32>
    %c0_2 = arith.constant 0 : index
    %c0_3 = arith.constant 0 : index
    %c0_4 = arith.constant 0 : index
    %2 = vector.load %arg4[%c0_2, %c0_3, %c0_4] : memref<1x7x128xf32, #tpu.memory_space<vmem>>, vector<1x7x128xf32>
    %3 = vector.shape_cast %2 : vector<1x7x128xf32> to vector<7x128xf32>
    %cst = arith.constant dense<0.000000e+00> : vector<7x7xf32>
    %4 = tpu.matmul %1, %3, %cst {dimension_numbers = #tpu.dot_dimension_numbers<[1], [1], [0], [0], [0, 0, 1, 0], [], []>} : vector<7x128xf32>, vector<7x128xf32>, vector<7x7xf32> -> vector<7x7xf32>
    %c0_5 = arith.constant 0 : index
    %c0_6 = arith.constant 0 : index
    %c0_7 = arith.constant 0 : index
    %5 = vector.load %arg7[%c0_5, %c0_6, %c0_7] : memref<1x7x7xf32, #tpu.memory_space<vmem>>, vector<1x7x7xf32>
    %6 = vector.shape_cast %5 : vector<1x7x7xf32> to vector<7x7xf32>
    %7 = vector.shape_cast %4 : vector<7x7xf32> to vector<1x7x7xf32>
    tpu.vector_store %arg7[%c0_5, %c0_6, %c0_7], %7 {strides = array<i32>} : memref<1x7x7xf32, #tpu.memory_space<vmem>>, vector<1x7x7xf32>,
    %c0_8 = arith.constant 0 : index
    %c0_9 = arith.constant 0 : index
    %c0_10 = arith.constant 0 : index
    %8 = vector.load %arg5[%c0_8, %c0_9, %c0_10] : memref<1x7x128xf32, #tpu.memory_space<vmem>>, vector<1x7x128xf32>
    %9 = vector.shape_cast %8 : vector<1x7x128xf32> to vector<7x128xf32>
    %c0_11 = arith.constant 0 : index
    %c0_12 = arith.constant 0 : index
    %c0_13 = arith.constant 0 : index
    %10 = vector.load %arg6[%c0_11, %c0_12, %c0_13] : memref<1x56x128xf32, #tpu.memory_space<vmem>>, vector<1x56x128xf32>
    %11 = vector.shape_cast %10 : vector<1x56x128xf32> to vector<56x128xf32>
    %cst_14 = arith.constant dense<0.000000e+00> : vector<7x56xf32>
    %12 = tpu.matmul %9, %11, %cst_14 {dimension_numbers = #tpu.dot_dimension_numbers<[1], [1], [0], [0], [0, 0, 1, 0], [], []>} : vector<7x128xf32>, vector<56x128xf32>, vector<7x56xf32> -> vector<7x56xf32>
    %c0_15 = arith.constant 0 : index
    %c0_16 = arith.constant 0 : index
    %c0_17 = arith.constant 0 : index
    %13 = vector.load %arg8[%c0_15, %c0_16, %c0_17] : memref<1x7x56xf32, #tpu.memory_space<vmem>>, vector<1x7x56xf32>
    %14 = vector.shape_cast %13 : vector<1x7x56xf32> to vector<7x56xf32>
    %15 = vector.shape_cast %12 : vector<7x56xf32> to vector<1x7x56xf32>
    tpu.vector_store %arg8[%c0_15, %c0_16, %c0_17], %15 {strides = array<i32>} : memref<1x7x56xf32, #tpu.memory_space<vmem>>, vector<1x7x56xf32>,
    return
  }
  func.func @transform_0(%arg0: i32, %arg1: i32, %arg2: i32) -> (i32, i32, i32) {
    %c0_i32 = arith.constant 0 : i32
    %c0_i32_0 = arith.constant 0 : i32
    return %arg0, %arg2, %c0_i32 : i32, i32, i32
  }
  func.func @transform_1(%arg0: i32, %arg1: i32, %arg2: i32) -> (i32, i32, i32) {
    %c0_i32 = arith.constant 0 : i32
    %c0_i32_0 = arith.constant 0 : i32
    return %arg0, %arg1, %c0_i32 : i32, i32, i32
  }
  func.func @transform_2(%arg0: i32, %arg1: i32, %arg2: i32) -> (i32, i32, i32) {
    %c0_i32 = arith.constant 0 : i32
    %c0_i32_0 = arith.constant 0 : i32
    return %arg0, %arg2, %c0_i32 : i32, i32, i32
  }
  func.func @transform_3(%arg0: i32, %arg1: i32, %arg2: i32) -> (i32, i32, i32) {
    %c0_i32 = arith.constant 0 : i32
    %c0_i32_0 = arith.constant 0 : i32
    return %arg0, %arg1, %c0_i32 : i32, i32, i32
  }
  func.func @transform_4(%arg0: i32, %arg1: i32, %arg2: i32) -> (i32, i32, i32) {
    %c0_i32 = arith.constant 0 : i32
    return %arg0, %arg2, %arg1 : i32, i32, i32
  }
  func.func @transform_5(%arg0: i32, %arg1: i32, %arg2: i32) -> (i32, i32, i32) {
    %c0_i32 = arith.constant 0 : i32
    return %arg0, %arg2, %arg1 : i32, i32, i32
  }
}

</mosaic_0001>

<llo_original>
// kernel: crf_constituency_forward.3
$region0: #{crf_constituency_forward.3}
  #allocation0 [shape = 'u32[]', space=smem, size = 0x4, offset = 0x4, fixed_abs, tag = 'smem constant byte address 0x4 - core index']
  #allocation1 [shape = 'u32[72,128]{1,0:T(1,128)}', space=vmem, size = 0x9000, scoped, tag = 'internal scratch']
  %s0 = inlined_call_operand.vmem [shape: f32[2,7,128], index: 0, kind: input, shape index: {}]
  %s1 = inlined_call_operand.vmem [shape: f32[2,7,128], index: 1, kind: input, shape index: {}]
  %s2 = inlined_call_operand.vmem [shape: f32[2,7,128], index: 2, kind: input, shape index: {}]
  %s3 = inlined_call_operand.vmem [shape: f32[2,56,128], index: 3, kind: input, shape index: {}]
  %s4 = inlined_call_operand.vmem [shape: f32[2,7,7], index: 4, kind: output, shape index: {0}]
  %s5 = inlined_call_operand.vmem [shape: f32[2,7,56], index: 5, kind: output, shape index: {1}]
  %6 = xla_tuple %s4, %s5
  %s7 = sld [smem:[#allocation0]]
  $region57: #{crf_constituency_forward.3} parent=0
    _
  %s9 = ssub.s32 1, %s7
  %s10 = scalar_select 0, %s9, %s7
  loop: start=0, step=1, limit=4
  $region2: #{crf_constituency_forward.3} parent=0 // loop_pre_header
    _
  $region3: #{crf_constituency_forward.3} parent=0 // loop_header
    %s12 = sphi 0, %s16
    %p13 = scmp.ge.s32.totalorder %s12, 4
    %s19 = sphi 0, %s38
    %s20 = sphi 0, %s34
    %s21 = sphi 0, %s30
    %s22 = sphi 0, %s19
    %s23 = sphi 0, %s20
    %s24 = sphi 0, %s21
    %s25 = sphi 0, %s22
    %s26 = sphi 0, %s23
    %s27 = sphi 0, %s24
    %s43 = sphi 0, %s45
    %s46 = sphi 0, %s43
    %s47 = sphi 0, %s46
    %s63 = sphi 0, %s47
    %s71 = sphi 0, %s73
    %s74 = sphi 0, %s71
    %s75 = sphi 0, %s74
    %s91 = sphi 0, %s75
    %s99 = sphi 0, %s101
    %s102 = sphi 0, %s99
    %s103 = sphi 0, %s102
    %s119 = sphi 0, %s103
    %s127 = sphi 0, %s129
    %s130 = sphi 0, %s127
    %s131 = sphi 0, %s130
    %s147 = sphi 0, %s131
    %s157 = sphi 0, %s159
    %s160 = sphi 0, %s157
    %s161 = sphi 0, %s160
    %s177 = sphi 0, %s161
    %s187 = sphi 0, %s189
    %s190 = sphi 0, %s187
    %s191 = sphi 0, %s190
    %s207 = sphi 0, %s191
  $region4: #{crf_constituency_forward.3} parent=0 // loop_header_branch
    %15 = sbr.rel (%p13) target = $region8
  $region5: #{crf_constituency_forward.3} parent=0 // loop_body
    %s17 = ssub.s32 %s12, 1
    %s18 = ssub.s32 %s12, 2
    %s28 = sadd.s32 1, %s21
    %p29 = scmp.ge.s32.totalorder %s28, 1
    %s30 = scalar_select %p29, 0, %s28
    %s31 = sadd.s32 1, %s20
    %s32 = scalar_select %p29, %s31, %s20
    %p33 = scmp.ge.s32.totalorder %s32, 1
    %s34 = scalar_select %p33, 0, %s32
    %s35 = sadd.s32 1, %s19
    %s36 = scalar_select %p33, %s35, %s19
    %p37 = scmp.ge.s32.totalorder %s36, 2
    %s38 = scalar_select %p37, 0, %s36
    %s39 = ssub.s32 %s19, %s38
    %s40 = ssub.s32 %s21, %s30
    %s41 = sor.u32 %s39, %s40
    %p42 = scmp.eq.s32.totalorder %s41, 0
    %s44 = sadd.s32 %s43, 1
    %s45 = scalar_select %p42, %s43, %s44
    %p48 = pneg %p42
    %p49 = scmp.eq.s32.totalorder %s12, 1
    %p50 = por %p48, %p49
    %p51 = scmp.ne.s32.totalorder %s43, %s46
    %p52 = scmp.eq.s32.totalorder %s12, 0
    %p53 = por %p51, %p52
    %p54 = scmp.ne.s32.totalorder %s43, %s46
    %p55 = scmp.eq.s32.totalorder %s17, 1
    %p56 = por %p54, %p55
    %p57 = scmp.ne.s32.totalorder %s46, %s47
    %p58 = scmp.eq.s32.totalorder %s17, 0
    %p59 = por %p57, %p58
    %p60 = scmp.ne.s32.totalorder %s46, %s47
    %p61 = scmp.eq.s32.totalorder %s18, 1
    %p62 = por %p60, %p61
    %p64 = scmp.ne.s32.totalorder %s47, %s63
    %p65 = scmp.eq.s32.totalorder %s18, 0
    %p66 = por %p64, %p65
    %s67 = ssub.s32 %s19, %s38
    %s68 = ssub.s32 %s20, %s34
    %s69 = sor.u32 %s67, %s68
    %p70 = scmp.eq.s32.totalorder %s69, 0
    %s72 = sadd.s32 %s71, 1
    %s73 = scalar_select %p70, %s71, %s72
    %p76 = pneg %p70
    %p77 = scmp.eq.s32.totalorder %s12, 1
    %p78 = por %p76, %p77
    %p79 = scmp.ne.s32.totalorder %s71, %s74
    %p80 = scmp.eq.s32.totalorder %s12, 0
    %p81 = por %p79, %p80
    %p82 = scmp.ne.s32.totalorder %s71, %s74
    %p83 = scmp.eq.s32.totalorder %s17, 1
    %p84 = por %p82, %p83
    %p85 = scmp.ne.s32.totalorder %s74, %s75
    %p86 = scmp.eq.s32.totalorder %s17, 0
    %p87 = por %p85, %p86
    %p88 = scmp.ne.s32.totalorder %s74, %s75
    %p89 = scmp.eq.s32.totalorder %s18, 1
    %p90 = por %p88, %p89
    %p92 = scmp.ne.s32.totalorder %s75, %s91
    %p93 = scmp.eq.s32.totalorder %s18, 0
    %p94 = por %p92, %p93
    %s95 = ssub.s32 %s19, %s38
    %s96 = ssub.s32 %s21, %s30
    %s97 = sor.u32 %s95, %s96
    %p98 = scmp.eq.s32.totalorder %s97, 0
    %s100 = sadd.s32 %s99, 1
    %s101 = scalar_select %p98, %s99, %s100
    %p104 = pneg %p98
    %p105 = scmp.eq.s32.totalorder %s12, 1
    %p106 = por %p104, %p105
    %p107 = scmp.ne.s32.totalorder %s99, %s102
    %p108 = scmp.eq.s32.totalorder %s12, 0
    %p109 = por %p107, %p108
    %p110 = scmp.ne.s32.totalorder %s99, %s102
    %p111 = scmp.eq.s32.totalorder %s17, 1
    %p112 = por %p110, %p111
    %p113 = scmp.ne.s32.totalorder %s102, %s103
    %p114 = scmp.eq.s32.totalorder %s17, 0
    %p115 = por %p113, %p114
    %p116 = scmp.ne.s32.totalorder %s102, %s103
    %p117 = scmp.eq.s32.totalorder %s18, 1
    %p118 = por %p116, %p117
    %p120 = scmp.ne.s32.totalorder %s103, %s119
    %p121 = scmp.eq.s32.totalorder %s18, 0
    %p122 = por %p120, %p121
    %s123 = ssub.s32 %s19, %s38
    %s124 = ssub.s32 %s20, %s34
    %s125 = sor.u32 %s123, %s124
    %p126 = scmp.eq.s32.totalorder %s125, 0
    %s128 = sadd.s32 %s127, 1
    %s129 = scalar_select %p126, %s127, %s128
    %p132 = pneg %p126
    %p133 = scmp.eq.s32.totalorder %s12, 1
    %p134 = por %p132, %p133
    %p135 = scmp.ne.s32.totalorder %s127, %s130
    %p136 = scmp.eq.s32.totalorder %s12, 0
    %p137 = por %p135, %p136
    %p138 = scmp.ne.s32.totalorder %s127, %s130
    %p139 = scmp.eq.s32.totalorder %s17, 1
    %p140 = por %p138, %p139
    %p141 = scmp.ne.s32.totalorder %s130, %s131
    %p142 = scmp.eq.s32.totalorder %s17, 0
    %p143 = por %p141, %p142
    %p144 = scmp.ne.s32.totalorder %s130, %s131
    %p145 = scmp.eq.s32.totalorder %s18, 1
    %p146 = por %p144, %p145
    %p148 = scmp.ne.s32.totalorder %s131, %s147
    %p149 = scmp.eq.s32.totalorder %s18, 0
    %p150 = por %p148, %p149
    %s151 = ssub.s32 %s19, %s38
    %s152 = ssub.s32 %s21, %s30
    %s153 = sor.u32 %s151, %s152
    %s154 = ssub.s32 %s20, %s34
    %s155 = sor.u32 %s153, %s154
    %p156 = scmp.eq.s32.totalorder %s155, 0
    %s158 = sadd.s32 %s157, 1
    %s159 = scalar_select %p156, %s157, %s158
    %p162 = pneg %p156
    %p163 = scmp.eq.s32.totalorder %s12, 1
    %p164 = por %p162, %p163
    %p165 = scmp.ne.s32.totalorder %s157, %s160
    %p166 = scmp.eq.s32.totalorder %s12, 0
    %p167 = por %p165, %p166
    %p168 = scmp.ne.s32.totalorder %s157, %s160
    %p169 = scmp.eq.s32.totalorder %s17, 1
    %p170 = por %p168, %p169
    %p171 = scmp.ne.s32.totalorder %s160, %s161
    %p172 = scmp.eq.s32.totalorder %s17, 0
    %p173 = por %p171, %p172
    %p174 = scmp.ne.s32.totalorder %s160, %s161
    %p175 = scmp.eq.s32.totalorder %s18, 1
    %p176 = por %p174, %p175
    %p178 = scmp.ne.s32.totalorder %s161, %s177
    %p179 = scmp.eq.s32.totalorder %s18, 0
    %p180 = por %p178, %p179
    %s181 = ssub.s32 %s19, %s38
    %s182 = ssub.s32 %s21, %s30
    %s183 = sor.u32 %s181, %s182
    %s184 = ssub.s32 %s20, %s34
    %s185 = sor.u32 %s183, %s184
    %p186 = scmp.eq.s32.totalorder %s185, 0
    %s188 = sadd.s32 %s187, 1
    %s189 = scalar_select %p186, %s187, %s188
    %p192 = pneg %p186
    %p193 = scmp.eq.s32.totalorder %s12, 1
    %p194 = por %p192, %p193
    %p195 = scmp.ne.s32.totalorder %s187, %s190
    %p196 = scmp.eq.s32.totalorder %s12, 0
    %p197 = por %p195, %p196
    %p198 = scmp.ne.s32.totalorder %s187, %s190
    %p199 = scmp.eq.s32.totalorder %s17, 1
    %p200 = por %p198, %p199
    %p201 = scmp.ne.s32.totalorder %s190, %s191
    %p202 = scmp.eq.s32.totalorder %s17, 0
    %p203 = por %p201, %p202
    %p204 = scmp.ne.s32.totalorder %s190, %s191
    %p205 = scmp.eq.s32.totalorder %s18, 1
    %p206 = por %p204, %p205
    %p208 = scmp.ne.s32.totalorder %s191, %s207
    %p209 = scmp.eq.s32.totalorder %s18, 0
    %p210 = por %p208, %p209
    %p211 = scmp.le.s32.totalorder 1, %s12
    %p212 = scmp.lt.s32.totalorder %s12, 3
    %p213 = pnand %p211, %p212
    %p214 = pneg %p213
    // Predicated region
    $region9: #{crf_constituency_forward.3} parent=5 // pred_check
      _
    $region10: #{crf_constituency_forward.3} parent=5 // pred_check_branch
      %216 = sbr.rel (%p213) target = $region12
    $region11: #{crf_constituency_forward.3} parent=5 // pred_region
      %s217 = ssub.s32 %s12, 1
    $region12: #{crf_constituency_forward.3} parent=5 // pred_fallthru
      _
    %p218 = scmp.lt.s32.totalorder %s12, 2
    // Predicated region
    $region13: #{crf_constituency_forward.3} parent=5 // pred_check
      %p219 = pneg %p218
    $region14: #{crf_constituency_forward.3} parent=5 // pred_check_branch
      %221 = sbr.rel (%p219) target = $region16
    $region15: #{crf_constituency_forward.3} parent=5 // pred_region
      // Predicated region
      $region17: #{crf_constituency_forward.3} parent=15 // pred_check
        %p222 = pneg %p53
      $region18: #{crf_constituency_forward.3} parent=15 // pred_check_branch
        %224 = sbr.rel (%p222) target = $region20
      $region19: #{crf_constituency_forward.3} parent=15 // pred_region
        %p225 = scmp.lt.s32.totalorder %s19, 1
        %s226 = scalar_select %p225, %s19, 1
        %p227 = scmp.lt.s32.totalorder %s21, 0
        %s228 = scalar_select %p227, %s21, 0
        %s229 = sadd.s32 %s228, %s226
        %s230 = smul.addr %s229, 8
        %s231 = scalar_lea.vmem %s0, %s230
      $region20: #{crf_constituency_forward.3} parent=15 // pred_fallthru
        _
      // Predicated region
      $region21: #{crf_constituency_forward.3} parent=15 // pred_check
        %p232 = pneg %p81
      $region22: #{crf_constituency_forward.3} parent=15 // pred_check_branch
        %234 = sbr.rel (%p232) target = $region24
      $region23: #{crf_constituency_forward.3} parent=15 // pred_region
        %p235 = scmp.lt.s32.totalorder %s19, 1
        %s236 = scalar_select %p235, %s19, 1
        %p237 = scmp.lt.s32.totalorder %s20, 0
        %s238 = scalar_select %p237, %s20, 0
        %s239 = sadd.s32 %s238, %s236
        %s240 = smul.addr %s239, 8
        %s241 = scalar_lea.vmem %s1, %s240
      $region24: #{crf_constituency_forward.3} parent=15 // pred_fallthru
        _
      // Predicated region
      $region25: #{crf_constituency_forward.3} parent=15 // pred_check
        %p242 = pneg %p109
      $region26: #{crf_constituency_forward.3} parent=15 // pred_check_branch
        %244 = sbr.rel (%p242) target = $region28
      $region27: #{crf_constituency_forward.3} parent=15 // pred_region
        %p245 = scmp.lt.s32.totalorder %s19, 1
        %s246 = scalar_select %p245, %s19, 1
        %p247 = scmp.lt.s32.totalorder %s21, 0
        %s248 = scalar_select %p247, %s21, 0
        %s249 = sadd.s32 %s248, %s246
        %s250 = smul.addr %s249, 8
        %s251 = scalar_lea.vmem %s2, %s250
      $region28: #{crf_constituency_forward.3} parent=15 // pred_fallthru
        _
      // Predicated region
      $region29: #{crf_constituency_forward.3} parent=15 // pred_check
        %p252 = pneg %p137
      $region30: #{crf_constituency_forward.3} parent=15 // pred_check_branch
        %254 = sbr.rel (%p252) target = $region32
      $region31: #{crf_constituency_forward.3} parent=15 // pred_region
        %s255 = smul.u32 7, %s20
        %p256 = scmp.lt.s32.totalorder %s19, 1
        %s257 = scalar_select %p256, %s19, 1
        %p258 = scmp.lt.s32.totalorder %s255, 6
        %s259 = scalar_select %p258, %s255, 6
        %s260 = smul.addr %s257, 7
        %s261 = sadd.s32 %s259, %s260
        %s262 = smul.addr %s261, 8
        %s263 = scalar_lea.vmem %s3, %s262
        %s264 = smul.u32 7, %s20
      $region32: #{crf_constituency_forward.3} parent=15 // pred_fallthru
        _
    $region16: #{crf_constituency_forward.3} parent=5 // pred_fallthru
      _
    %p265 = scmp.le.s32.totalorder 1, %s12
    %p266 = scmp.lt.s32.totalorder %s12, 3
    %p267 = pnand %p265, %p266
    %p268 = pneg %p267
    // Predicated region
    $region33: #{crf_constituency_forward.3} parent=5 // pred_check
      _
    $region34: #{crf_constituency_forward.3} parent=5 // pred_check_branch
      %270 = sbr.rel (%p267) target = $region36
    $region35: #{crf_constituency_forward.3} parent=5 // pred_region
      %s271 = ssub.s32 %s12, 1
      %p272 = scmp.lt.s32.totalorder %s22, 1
      %s273 = scalar_select %p272, %s22, 1
      %p274 = scmp.lt.s32.totalorder %s24, 0
      %s275 = scalar_select %p274, %s24, 0
      %s276 = sadd.s32 %s275, %s273
      %s277 = smul.addr %s276, 8
      %s278 = scalar_lea.vmem %s0, %s277
      %p279 = pneg %p59
      %p280 = pneg %p56
      %p281 = scmp.lt.s32.totalorder %s22, 1
      %s282 = scalar_select %p281, %s22, 1
      %p283 = scmp.lt.s32.totalorder %s23, 0
      %s284 = scalar_select %p283, %s23, 0
      %s285 = sadd.s32 %s284, %s282
      %s286 = smul.addr %s285, 8
      %s287 = scalar_lea.vmem %s1, %s286
      %p288 = pneg %p87
      %p289 = pneg %p84
      %p290 = scmp.lt.s32.totalorder %s22, 1
      %s291 = scalar_select %p290, %s22, 1
      %p292 = scmp.lt.s32.totalorder %s24, 0
      %s293 = scalar_select %p292, %s24, 0
      %s294 = sadd.s32 %s293, %s291
      %s295 = smul.addr %s294, 8
      %s296 = scalar_lea.vmem %s2, %s295
      %p297 = pneg %p115
      %p298 = pneg %p112
      %s299 = smul.u32 7, %s23
      %p300 = scmp.lt.s32.totalorder %s22, 1
      %s301 = scalar_select %p300, %s22, 1
      %p302 = scmp.lt.s32.totalorder %s299, 6
      %s303 = scalar_select %p302, %s299, 6
      %s304 = smul.addr %s301, 7
      %s305 = sadd.s32 %s303, %s304
      %s306 = smul.addr %s305, 8
      %s307 = scalar_lea.vmem %s3, %s306
      %p308 = pneg %p143
      %p309 = pneg %p140
      %p310 = pneg %p173
      %p311 = pneg %p170
      %p312 = scmp.lt.s32.totalorder %s22, 1
      %s313 = scalar_select %p312, %s22, 1
      %p314 = scmp.lt.s32.totalorder %s24, 0
      %s315 = scalar_select %p314, %s24, 0
      %p316 = scmp.lt.s32.totalorder %s23, 0
      %s317 = scalar_select %p316, %s23, 0
      %s318 = sadd.s32 %s317, %s315
      %s319 = sadd.s32 %s318, %s313
      %s320 = smul.addr %s319, 8
      %s321 = scalar_lea.vmem %s4, %s320
      %p322 = pneg %p203
      %p323 = pneg %p200
      %p324 = scmp.lt.s32.totalorder %s22, 1
      %s325 = scalar_select %p324, %s22, 1
      %p326 = scmp.lt.s32.totalorder %s24, 0
      %s327 = scalar_select %p326, %s24, 0
      %p328 = scmp.lt.s32.totalorder %s23, 0
      %s329 = scalar_select %p328, %s23, 0
      %s330 = sadd.s32 %s329, %s327
      %s331 = sadd.s32 %s330, %s325
      %s332 = smul.addr %s331, 8
      %s333 = scalar_lea.vmem %s5, %s332
      %p334 = scmp.lt.s32.totalorder %s22, 1
      %s335 = scalar_select %p334, %s22, 1
      %p336 = scmp.lt.s32.totalorder %s24, 0
      %s337 = scalar_select %p336, %s24, 0
      %s338 = sadd.s32 %s337, %s335
      %s339 = smul.addr %s338, 8
      %s340 = scalar_lea.vmem %s0, %s339
      %p341 = scmp.lt.s32.totalorder %s22, 1
      %s342 = scalar_select %p341, %s22, 1
      %p343 = scmp.lt.s32.totalorder %s23, 0
      %s344 = scalar_select %p343, %s23, 0
      %s345 = sadd.s32 %s344, %s342
      %s346 = smul.addr %s345, 8
      %s347 = scalar_lea.vmem %s1, %s346
      %p348 = scmp.lt.s32.totalorder %s22, 1
      %s349 = scalar_select %p348, %s22, 1
      %p350 = scmp.lt.s32.totalorder %s24, 0
      %s351 = scalar_select %p350, %s24, 0
      %s352 = sadd.s32 %s351, %s349
      %s353 = smul.addr %s352, 8
      %s354 = scalar_lea.vmem %s2, %s353
      %s355 = smul.u32 7, %s23
      %p356 = scmp.lt.s32.totalorder %s22, 1
      %s357 = scalar_select %p356, %s22, 1
      %p358 = scmp.lt.s32.totalorder %s355, 6
      %s359 = scalar_select %p358, %s355, 6
      %s360 = smul.addr %s357, 7
      %s361 = sadd.s32 %s359, %s360
      %s362 = smul.addr %s361, 8
      %s363 = scalar_lea.vmem %s3, %s362
      %s364 = smul.u32 7, %s23
      %p365 = scmp.lt.s32.totalorder %s22, 1
      %s366 = scalar_select %p365, %s22, 1
      %p367 = scmp.lt.s32.totalorder %s24, 0
      %s368 = scalar_select %p367, %s24, 0
      %p369 = scmp.lt.s32.totalorder %s23, 0
      %s370 = scalar_select %p369, %s23, 0
      %s371 = sadd.s32 %s370, %s368
      %s372 = sadd.s32 %s371, %s366
      %s373 = smul.addr %s372, 8
      %s374 = scalar_lea.vmem %s4, %s373
      %p375 = scmp.lt.s32.totalorder %s22, 1
      %s376 = scalar_select %p375, %s22, 1
      %p377 = scmp.lt.s32.totalorder %s24, 0
      %s378 = scalar_select %p377, %s24, 0
      %p379 = scmp.lt.s32.totalorder %s23, 0
      %s380 = scalar_select %p379, %s23, 0
      %s381 = sadd.s32 %s380, %s378
      %s382 = sadd.s32 %s381, %s376
      %s383 = smul.addr %s382, 8
      %s384 = scalar_lea.vmem %s5, %s383
      %v385 = vld [vmem:[%s340] sm:$0x7f]
      %v386 = vld [vmem:[%s347] sm:$0x7f]
      %387 = vmatpush.xpose.msra.mxu0 0.0
      %388 = vmatpush.xpose.msra.mxu0 0.0
      %389 = vmatpush.xpose.msra.mxu0 0.0
      %390 = vmatpush.xpose.msra.mxu0 0.0
      %391 = vmatpush.xpose.msra.mxu0 0.0
      %392 = vmatpush.xpose.msra.mxu0 0.0
      %393 = vmatpush.xpose.msra.mxu0 0.0
      %394 = vmatpush.xpose.msra.mxu0 0.0
      %395 = vmatpush.xpose.msra.mxu0 0.0
      %396 = vmatpush.xpose.msra.mxu0 0.0
      %397 = vmatpush.xpose.msra.mxu0 0.0
      %398 = vmatpush.xpose.msra.mxu0 0.0
      %399 = vmatpush.xpose.msra.mxu0 0.0
      %400 = vmatpush.xpose.msra.mxu0 0.0
      %401 = vmatpush.xpose.msra.mxu0 0.0
      %402 = vmatpush.xpose.msra.mxu0 %v386
      %403 = vmatmul.f32.gmra.mxu0 %v385
      %v404 = vpop.f32.mrf.mxu0
      %v405 = vadd.f32 0.0, %v404
      %406 = vdwg.mxu0
      %vm407 = vcmask 55296
      %408 = vst.msk [vmem:[%s374] sm:$0x7f] %vm407, %v405
      %v409 = vld [vmem:[%s354] sm:$0x7f]
      %v410 = vld [vmem:[%s363] sm:$0xff]
      %v411 = vld [vmem:[%s363 + $0x8] sm:$0xff]
      %v412 = vld [vmem:[%s363 + $0x10] sm:$0xff]
      %v413 = vld [vmem:[%s363 + $0x18] sm:$0xff]
      %v414 = vld [vmem:[%s363 + $0x20] sm:$0xff]
      %v415 = vld [vmem:[%s363 + $0x28] sm:$0xff]
      %v416 = vld [vmem:[%s363 + $0x30] sm:$0xff]
      %417 = vmatpush.xpose.msra.mxu0 0.0
      %418 = vmatpush.xpose.msra.mxu0 0.0
      %419 = vmatpush.xpose.msra.mxu0 0.0
      %420 = vmatpush.xpose.msra.mxu0 0.0
      %421 = vmatpush.xpose.msra.mxu0 0.0
      %422 = vmatpush.xpose.msra.mxu0 0.0
      %423 = vmatpush.xpose.msra.mxu0 0.0
      %424 = vmatpush.xpose.msra.mxu0 0.0
      %425 = vmatpush.xpose.msra.mxu0 0.0
      %426 = vmatpush.xpose.msra.mxu0 %v416
      %427 = vmatpush.xpose.msra.mxu0 %v415
      %428 = vmatpush.xpose.msra.mxu0 %v414
      %429 = vmatpush.xpose.msra.mxu0 %v413
      %430 = vmatpush.xpose.msra.mxu0 %v412
      %431 = vmatpush.xpose.msra.mxu0 %v411
      %432 = vmatpush.xpose.msra.mxu0 %v410
      %433 = vmatmul.f32.gmra.mxu0 %v409
      %v434 = vpop.f32.mrf.mxu0
      %v435 = vadd.f32 0.0, %v434
      %436 = vdwg.mxu0
      %vm437 = vcmask 456704
      %438 = vst.msk [vmem:[%s384] sm:$0x7f] %vm437, %v435
      %p439 = scmp.lt.s32.totalorder %s22, 1
      %s440 = scalar_select %p439, %s22, 1
      %p441 = scmp.lt.s32.totalorder %s24, 0
      %s442 = scalar_select %p441, %s24, 0
      %p443 = scmp.lt.s32.totalorder %s23, 0
      %s444 = scalar_select %p443, %s23, 0
      %s445 = sadd.s32 %s444, %s442
      %s446 = sadd.s32 %s445, %s440
      %s447 = smul.addr %s446, 8
      %s448 = scalar_lea.vmem %s4, %s447
      %p449 = scmp.lt.s32.totalorder %s22, 1
      %s450 = scalar_select %p449, %s22, 1
      %p451 = scmp.lt.s32.totalorder %s24, 0
      %s452 = scalar_select %p451, %s24, 0
      %p453 = scmp.lt.s32.totalorder %s23, 0
      %s454 = scalar_select %p453, %s23, 0
      %s455 = sadd.s32 %s454, %s452
      %s456 = sadd.s32 %s455, %s450
      %s457 = smul.addr %s456, 8
      %s458 = scalar_lea.vmem %s5, %s457
      // Predicated region
      $region37: #{crf_constituency_forward.3} parent=35 // pred_check
        %p459 = pneg %p170
      $region38: #{crf_constituency_forward.3} parent=35 // pred_check_branch
        %461 = sbr.rel (%p459) target = $region40
      $region39: #{crf_constituency_forward.3} parent=35 // pred_region
        _
      $region40: #{crf_constituency_forward.3} parent=35 // pred_fallthru
        _
      // Predicated region
      $region41: #{crf_constituency_forward.3} parent=35 // pred_check
        %p462 = pneg %p200
      $region42: #{crf_constituency_forward.3} parent=35 // pred_check_branch
        %464 = sbr.rel (%p462) target = $region44
      $region43: #{crf_constituency_forward.3} parent=35 // pred_region
        _
      $region44: #{crf_constituency_forward.3} parent=35 // pred_fallthru
        _
    $region36: #{crf_constituency_forward.3} parent=5 // pred_fallthru
      _
    %p465 = scmp.le.s32.totalorder 2, %s12
    // Predicated region
    $region45: #{crf_constituency_forward.3} parent=5 // pred_check
      %p466 = pneg %p465
    $region46: #{crf_constituency_forward.3} parent=5 // pred_check_branch
      %468 = sbr.rel (%p466) target = $region48
    $region47: #{crf_constituency_forward.3} parent=5 // pred_region
      %s469 = ssub.s32 %s12, 2
      // Predicated region
      $region49: #{crf_constituency_forward.3} parent=47 // pred_check
        %p470 = pneg %p176
      $region50: #{crf_constituency_forward.3} parent=47 // pred_check_branch
        %472 = sbr.rel (%p470) target = $region52
      $region51: #{crf_constituency_forward.3} parent=47 // pred_region
        %p473 = scmp.lt.s32.totalorder %s25, 1
        %s474 = scalar_select %p473, %s25, 1
        %p475 = scmp.lt.s32.totalorder %s27, 0
        %s476 = scalar_select %p475, %s27, 0
        %p477 = scmp.lt.s32.totalorder %s26, 0
        %s478 = scalar_select %p477, %s26, 0
        %s479 = sadd.s32 %s478, %s476
        %s480 = sadd.s32 %s479, %s474
        %s481 = smul.addr %s480, 8
        %s482 = scalar_lea.vmem %s4, %s481
      $region52: #{crf_constituency_forward.3} parent=47 // pred_fallthru
        _
      // Predicated region
      $region53: #{crf_constituency_forward.3} parent=47 // pred_check
        %p483 = pneg %p206
      $region54: #{crf_constituency_forward.3} parent=47 // pred_check_branch
        %485 = sbr.rel (%p483) target = $region56
      $region55: #{crf_constituency_forward.3} parent=47 // pred_region
        %p486 = scmp.lt.s32.totalorder %s25, 1
        %s487 = scalar_select %p486, %s25, 1
        %p488 = scmp.lt.s32.totalorder %s27, 0
        %s489 = scalar_select %p488, %s27, 0
        %p490 = scmp.lt.s32.totalorder %s26, 0
        %s491 = scalar_select %p490, %s26, 0
        %s492 = sadd.s32 %s491, %s489
        %s493 = sadd.s32 %s492, %s487
        %s494 = smul.addr %s493, 8
        %s495 = scalar_lea.vmem %s5, %s494
      $region56: #{crf_constituency_forward.3} parent=47 // pred_fallthru
        _
    $region48: #{crf_constituency_forward.3} parent=5 // pred_fallthru
      _
  $region6: #{crf_constituency_forward.3} parent=0 // loop_footer
    %s16 = sadd.s32 1, %s12
  $region7: #{crf_constituency_forward.3} parent=0 // loop_footer_branch
    %11 = sbr.rel target = $region3
  $region8: #{crf_constituency_forward.3} parent=0 // loop_exit
    _

// kernel: crf_constituency_forward.2
$region0: #{crf_constituency_forward.2}
  #allocation0 [shape = 'u32[]', space=smem, size = 0x4, offset = 0x4, fixed_abs, tag = 'smem constant byte address 0x4 - core index']
  #allocation1 [shape = 'u32[72,128]{1,0:T(1,128)}', space=vmem, size = 0x9000, scoped, tag = 'internal scratch']
  %s0 = inlined_call_operand.vmem [shape: f32[2,7,16], index: 0, kind: input, shape index: {}]
  %s1 = inlined_call_operand.vmem [shape: f32[2,7,16], index: 1, kind: input, shape index: {}]
  %s2 = inlined_call_operand.vmem [shape: f32[16,512], index: 2, kind: input, shape index: {}]
  %s3 = inlined_call_operand.vmem [shape: f32[16,512], index: 3, kind: input, shape index: {}]
  %s4 = inlined_call_operand.vmem [shape: f32[1,512], index: 4, kind: input, shape index: {}]
  %s5 = inlined_call_operand.vmem [shape: f32[128,128], index: 5, kind: input, shape index: {}]
  %s6 = inlined_call_operand.vmem [shape: f32[1,128], index: 6, kind: input, shape index: {}]
  %s7 = inlined_call_operand.vmem [shape: f32[128,1024], index: 7, kind: input, shape index: {}]
  %s8 = inlined_call_operand.vmem [shape: f32[1,1024], index: 8, kind: input, shape index: {}]
  %s9 = inlined_call_operand.vmem [shape: f32[2,7,128], index: 9, kind: output, shape index: {0}]
  %s10 = inlined_call_operand.vmem [shape: f32[2,7,128], index: 10, kind: output, shape index: {1}]
  %s11 = inlined_call_operand.vmem [shape: f32[2,7,128], index: 11, kind: output, shape index: {2}]
  %s12 = inlined_call_operand.vmem [shape: f32[2,7,1024], index: 12, kind: output, shape index: {3}]
  %13 = xla_tuple %s9, %s10, %s11, %s12
  %s14 = sld [smem:[#allocation0]]
  $region93: #{crf_constituency_forward.2} parent=0
    _
  %s16 = ssub.s32 1, %s14
  %s17 = scalar_select 0, %s16, %s14
  loop: start=0, step=1, limit=4
  $region2: #{crf_constituency_forward.2} parent=0 // loop_pre_header
    _
  $region3: #{crf_constituency_forward.2} parent=0 // loop_header
    %s19 = sphi 0, %s23
    %p20 = scmp.ge.s32.totalorder %s19, 4
    %s26 = sphi 0, %s38
    %s27 = sphi 0, %s34
    %s28 = sphi 0, %s26
    %s29 = sphi 0, %s27
    %s30 = sphi 0, %s28
    %s31 = sphi 0, %s29
    %s43 = sphi 0, %s45
    %s46 = sphi 0, %s43
    %s47 = sphi 0, %s46
    %s63 = sphi 0, %s47
    %s71 = sphi 0, %s73
    %s74 = sphi 0, %s71
    %s75 = sphi 0, %s74
    %s91 = sphi 0, %s75
    %s95 = sphi 0, %s95
    %s97 = sphi 0, %s95
    %s98 = sphi 0, %s97
    %s112 = sphi 0, %s98
    %s116 = sphi 0, %s116
    %s118 = sphi 0, %s116
    %s119 = sphi 0, %s118
    %s133 = sphi 0, %s119
    %s137 = sphi 0, %s137
    %s139 = sphi 0, %s137
    %s140 = sphi 0, %s139
    %s154 = sphi 0, %s140
    %s158 = sphi 0, %s158
    %s160 = sphi 0, %s158
    %s161 = sphi 0, %s160
    %s175 = sphi 0, %s161
    %s179 = sphi 0, %s179
    %s181 = sphi 0, %s179
    %s182 = sphi 0, %s181
    %s196 = sphi 0, %s182
    %s200 = sphi 0, %s200
    %s202 = sphi 0, %s200
    %s203 = sphi 0, %s202
    %s217 = sphi 0, %s203
    %s221 = sphi 0, %s221
    %s223 = sphi 0, %s221
    %s224 = sphi 0, %s223
    %s238 = sphi 0, %s224
    %s246 = sphi 0, %s248
    %s249 = sphi 0, %s246
    %s250 = sphi 0, %s249
    %s266 = sphi 0, %s250
    %s274 = sphi 0, %s276
    %s277 = sphi 0, %s274
    %s278 = sphi 0, %s277
    %s294 = sphi 0, %s278
    %s302 = sphi 0, %s304
    %s305 = sphi 0, %s302
    %s306 = sphi 0, %s305
    %s322 = sphi 0, %s306
    %s330 = sphi 0, %s332
    %s333 = sphi 0, %s330
    %s334 = sphi 0, %s333
    %s350 = sphi 0, %s334
  $region4: #{crf_constituency_forward.2} parent=0 // loop_header_branch
    %22 = sbr.rel (%p20) target = $region8
  $region5: #{crf_constituency_forward.2} parent=0 // loop_body
    %s24 = ssub.s32 %s19, 1
    %s25 = ssub.s32 %s19, 2
    %s32 = sadd.s32 1, %s27
    %p33 = scmp.ge.s32.totalorder %s32, 1
    %s34 = scalar_select %p33, 0, %s32
    %s35 = sadd.s32 1, %s26
    %s36 = scalar_select %p33, %s35, %s26
    %p37 = scmp.ge.s32.totalorder %s36, 2
    %s38 = scalar_select %p37, 0, %s36
    %s39 = ssub.s32 %s26, %s38
    %s40 = ssub.s32 %s27, %s34
    %s41 = sor.u32 %s39, %s40
    %p42 = scmp.eq.s32.totalorder %s41, 0
    %s44 = sadd.s32 %s43, 1
    %s45 = scalar_select %p42, %s43, %s44
    %p48 = pneg %p42
    %p49 = scmp.eq.s32.totalorder %s19, 1
    %p50 = por %p48, %p49
    %p51 = scmp.ne.s32.totalorder %s43, %s46
    %p52 = scmp.eq.s32.totalorder %s19, 0
    %p53 = por %p51, %p52
    %p54 = scmp.ne.s32.totalorder %s43, %s46
    %p55 = scmp.eq.s32.totalorder %s24, 1
    %p56 = por %p54, %p55
    %p57 = scmp.ne.s32.totalorder %s46, %s47
    %p58 = scmp.eq.s32.totalorder %s24, 0
    %p59 = por %p57, %p58
    %p60 = scmp.ne.s32.totalorder %s46, %s47
    %p61 = scmp.eq.s32.totalorder %s25, 1
    %p62 = por %p60, %p61
    %p64 = scmp.ne.s32.totalorder %s47, %s63
    %p65 = scmp.eq.s32.totalorder %s25, 0
    %p66 = por %p64, %p65
    %s67 = ssub.s32 %s26, %s38
    %s68 = ssub.s32 %s27, %s34
    %s69 = sor.u32 %s67, %s68
    %p70 = scmp.eq.s32.totalorder %s69, 0
    %s72 = sadd.s32 %s71, 1
    %s73 = scalar_select %p70, %s71, %s72
    %p76 = pneg %p70
    %p77 = scmp.eq.s32.totalorder %s19, 1
    %p78 = por %p76, %p77
    %p79 = scmp.ne.s32.totalorder %s71, %s74
    %p80 = scmp.eq.s32.totalorder %s19, 0
    %p81 = por %p79, %p80
    %p82 = scmp.ne.s32.totalorder %s71, %s74
    %p83 = scmp.eq.s32.totalorder %s24, 1
    %p84 = por %p82, %p83
    %p85 = scmp.ne.s32.totalorder %s74, %s75
    %p86 = scmp.eq.s32.totalorder %s24, 0
    %p87 = por %p85, %p86
    %p88 = scmp.ne.s32.totalorder %s74, %s75
    %p89 = scmp.eq.s32.totalorder %s25, 1
    %p90 = por %p88, %p89
    %p92 = scmp.ne.s32.totalorder %s75, %s91
    %p93 = scmp.eq.s32.totalorder %s25, 0
    %p94 = por %p92, %p93
    %s96 = sadd.s32 %s95, 1
    %p99 = scmp.eq.s32.totalorder %s19, 1
    %p100 = scmp.ne.s32.totalorder %s95, %s97
    %p101 = scmp.eq.s32.totalorder %s19, 0
    %p102 = por %p100, %p101
    %p103 = scmp.ne.s32.totalorder %s95, %s97
    %p104 = scmp.eq.s32.totalorder %s24, 1
    %p105 = por %p103, %p104
    %p106 = scmp.ne.s32.totalorder %s97, %s98
    %p107 = scmp.eq.s32.totalorder %s24, 0
    %p108 = por %p106, %p107
    %p109 = scmp.ne.s32.totalorder %s97, %s98
    %p110 = scmp.eq.s32.totalorder %s25, 1
    %p111 = por %p109, %p110
    %p113 = scmp.ne.s32.totalorder %s98, %s112
    %p114 = scmp.eq.s32.totalorder %s25, 0
    %p115 = por %p113, %p114
    %s117 = sadd.s32 %s116, 1
    %p120 = scmp.eq.s32.totalorder %s19, 1
    %p121 = scmp.ne.s32.totalorder %s116, %s118
    %p122 = scmp.eq.s32.totalorder %s19, 0
    %p123 = por %p121, %p122
    %p124 = scmp.ne.s32.totalorder %s116, %s118
    %p125 = scmp.eq.s32.totalorder %s24, 1
    %p126 = por %p124, %p125
    %p127 = scmp.ne.s32.totalorder %s118, %s119
    %p128 = scmp.eq.s32.totalorder %s24, 0
    %p129 = por %p127, %p128
    %p130 = scmp.ne.s32.totalorder %s118, %s119
    %p131 = scmp.eq.s32.totalorder %s25, 1
    %p132 = por %p130, %p131
    %p134 = scmp.ne.s32.totalorder %s119, %s133
    %p135 = scmp.eq.s32.totalorder %s25, 0
    %p136 = por %p134, %p135
    %s138 = sadd.s32 %s137, 1
    %p141 = scmp.eq.s32.totalorder %s19, 1
    %p142 = scmp.ne.s32.totalorder %s137, %s139
    %p143 = scmp.eq.s32.totalorder %s19, 0
    %p144 = por %p142, %p143
    %p145 = scmp.ne.s32.totalorder %s137, %s139
    %p146 = scmp.eq.s32.totalorder %s24, 1
    %p147 = por %p145, %p146
    %p148 = scmp.ne.s32.totalorder %s139, %s140
    %p149 = scmp.eq.s32.totalorder %s24, 0
    %p150 = por %p148, %p149
    %p151 = scmp.ne.s32.totalorder %s139, %s140
    %p152 = scmp.eq.s32.totalorder %s25, 1
    %p153 = por %p151, %p152
    %p155 = scmp.ne.s32.totalorder %s140, %s154
    %p156 = scmp.eq.s32.totalorder %s25, 0
    %p157 = por %p155, %p156
    %s159 = sadd.s32 %s158, 1
    %p162 = scmp.eq.s32.totalorder %s19, 1
    %p163 = scmp.ne.s32.totalorder %s158, %s160
    %p164 = scmp.eq.s32.totalorder %s19, 0
    %p165 = por %p163, %p164
    %p166 = scmp.ne.s32.totalorder %s158, %s160
    %p167 = scmp.eq.s32.totalorder %s24, 1
    %p168 = por %p166, %p167
    %p169 = scmp.ne.s32.totalorder %s160, %s161
    %p170 = scmp.eq.s32.totalorder %s24, 0
    %p171 = por %p169, %p170
    %p172 = scmp.ne.s32.totalorder %s160, %s161
    %p173 = scmp.eq.s32.totalorder %s25, 1
    %p174 = por %p172, %p173
    %p176 = scmp.ne.s32.totalorder %s161, %s175
    %p177 = scmp.eq.s32.totalorder %s25, 0
    %p178 = por %p176, %p177
    %s180 = sadd.s32 %s179, 1
    %p183 = scmp.eq.s32.totalorder %s19, 1
    %p184 = scmp.ne.s32.totalorder %s179, %s181
    %p185 = scmp.eq.s32.totalorder %s19, 0
    %p186 = por %p184, %p185
    %p187 = scmp.ne.s32.totalorder %s179, %s181
    %p188 = scmp.eq.s32.totalorder %s24, 1
    %p189 = por %p187, %p188
    %p190 = scmp.ne.s32.totalorder %s181, %s182
    %p191 = scmp.eq.s32.totalorder %s24, 0
    %p192 = por %p190, %p191
    %p193 = scmp.ne.s32.totalorder %s181, %s182
    %p194 = scmp.eq.s32.totalorder %s25, 1
    %p195 = por %p193, %p194
    %p197 = scmp.ne.s32.totalorder %s182, %s196
    %p198 = scmp.eq.s32.totalorder %s25, 0
    %p199 = por %p197, %p198
    %s201 = sadd.s32 %s200, 1
    %p204 = scmp.eq.s32.totalorder %s19, 1
    %p205 = scmp.ne.s32.totalorder %s200, %s202
    %p206 = scmp.eq.s32.totalorder %s19, 0
    %p207 = por %p205, %p206
    %p208 = scmp.ne.s32.totalorder %s200, %s202
    %p209 = scmp.eq.s32.totalorder %s24, 1
    %p210 = por %p208, %p209
    %p211 = scmp.ne.s32.totalorder %s202, %s203
    %p212 = scmp.eq.s32.totalorder %s24, 0
    %p213 = por %p211, %p212
    %p214 = scmp.ne.s32.totalorder %s202, %s203
    %p215 = scmp.eq.s32.totalorder %s25, 1
    %p216 = por %p214, %p215
    %p218 = scmp.ne.s32.totalorder %s203, %s217
    %p219 = scmp.eq.s32.totalorder %s25, 0
    %p220 = por %p218, %p219
    %s222 = sadd.s32 %s221, 1
    %p225 = scmp.eq.s32.totalorder %s19, 1
    %p226 = scmp.ne.s32.totalorder %s221, %s223
    %p227 = scmp.eq.s32.totalorder %s19, 0
    %p228 = por %p226, %p227
    %p229 = scmp.ne.s32.totalorder %s221, %s223
    %p230 = scmp.eq.s32.totalorder %s24, 1
    %p231 = por %p229, %p230
    %p232 = scmp.ne.s32.totalorder %s223, %s224
    %p233 = scmp.eq.s32.totalorder %s24, 0
    %p234 = por %p232, %p233
    %p235 = scmp.ne.s32.totalorder %s223, %s224
    %p236 = scmp.eq.s32.totalorder %s25, 1
    %p237 = por %p235, %p236
    %p239 = scmp.ne.s32.totalorder %s224, %s238
    %p240 = scmp.eq.s32.totalorder %s25, 0
    %p241 = por %p239, %p240
    %s242 = ssub.s32 %s26, %s38
    %s243 = ssub.s32 %s27, %s34
    %s244 = sor.u32 %s242, %s243
    %p245 = scmp.eq.s32.totalorder %s244, 0
    %s247 = sadd.s32 %s246, 1
    %s248 = scalar_select %p245, %s246, %s247
    %p251 = pneg %p245
    %p252 = scmp.eq.s32.totalorder %s19, 1
    %p253 = por %p251, %p252
    %p254 = scmp.ne.s32.totalorder %s246, %s249
    %p255 = scmp.eq.s32.totalorder %s19, 0
    %p256 = por %p254, %p255
    %p257 = scmp.ne.s32.totalorder %s246, %s249
    %p258 = scmp.eq.s32.totalorder %s24, 1
    %p259 = por %p257, %p258
    %p260 = scmp.ne.s32.totalorder %s249, %s250
    %p261 = scmp.eq.s32.totalorder %s24, 0
    %p262 = por %p260, %p261
    %p263 = scmp.ne.s32.totalorder %s249, %s250
    %p264 = scmp.eq.s32.totalorder %s25, 1
    %p265 = por %p263, %p264
    %p267 = scmp.ne.s32.totalorder %s250, %s266
    %p268 = scmp.eq.s32.totalorder %s25, 0
    %p269 = por %p267, %p268
    %s270 = ssub.s32 %s26, %s38
    %s271 = ssub.s32 %s27, %s34
    %s272 = sor.u32 %s270, %s271
    %p273 = scmp.eq.s32.totalorder %s272, 0
    %s275 = sadd.s32 %s274, 1
    %s276 = scalar_select %p273, %s274, %s275
    %p279 = pneg %p273
    %p280 = scmp.eq.s32.totalorder %s19, 1
    %p281 = por %p279, %p280
    %p282 = scmp.ne.s32.totalorder %s274, %s277
    %p283 = scmp.eq.s32.totalorder %s19, 0
    %p284 = por %p282, %p283
    %p285 = scmp.ne.s32.totalorder %s274, %s277
    %p286 = scmp.eq.s32.totalorder %s24, 1
    %p287 = por %p285, %p286
    %p288 = scmp.ne.s32.totalorder %s277, %s278
    %p289 = scmp.eq.s32.totalorder %s24, 0
    %p290 = por %p288, %p289
    %p291 = scmp.ne.s32.totalorder %s277, %s278
    %p292 = scmp.eq.s32.totalorder %s25, 1
    %p293 = por %p291, %p292
    %p295 = scmp.ne.s32.totalorder %s278, %s294
    %p296 = scmp.eq.s32.totalorder %s25, 0
    %p297 = por %p295, %p296
    %s298 = ssub.s32 %s26, %s38
    %s299 = ssub.s32 %s27, %s34
    %s300 = sor.u32 %s298, %s299
    %p301 = scmp.eq.s32.totalorder %s300, 0
    %s303 = sadd.s32 %s302, 1
    %s304 = scalar_select %p301, %s302, %s303
    %p307 = pneg %p301
    %p308 = scmp.eq.s32.totalorder %s19, 1
    %p309 = por %p307, %p308
    %p310 = scmp.ne.s32.totalorder %s302, %s305
    %p311 = scmp.eq.s32.totalorder %s19, 0
    %p312 = por %p310, %p311
    %p313 = scmp.ne.s32.totalorder %s302, %s305
    %p314 = scmp.eq.s32.totalorder %s24, 1
    %p315 = por %p313, %p314
    %p316 = scmp.ne.s32.totalorder %s305, %s306
    %p317 = scmp.eq.s32.totalorder %s24, 0
    %p318 = por %p316, %p317
    %p319 = scmp.ne.s32.totalorder %s305, %s306
    %p320 = scmp.eq.s32.totalorder %s25, 1
    %p321 = por %p319, %p320
    %p323 = scmp.ne.s32.totalorder %s306, %s322
    %p324 = scmp.eq.s32.totalorder %s25, 0
    %p325 = por %p323, %p324
    %s326 = ssub.s32 %s26, %s38
    %s327 = ssub.s32 %s27, %s34
    %s328 = sor.u32 %s326, %s327
    %p329 = scmp.eq.s32.totalorder %s328, 0
    %s331 = sadd.s32 %s330, 1
    %s332 = scalar_select %p329, %s330, %s331
    %p335 = pneg %p329
    %p336 = scmp.eq.s32.totalorder %s19, 1
    %p337 = por %p335, %p336
    %p338 = scmp.ne.s32.totalorder %s330, %s333
    %p339 = scmp.eq.s32.totalorder %s19, 0
    %p340 = por %p338, %p339
    %p341 = scmp.ne.s32.totalorder %s330, %s333
    %p342 = scmp.eq.s32.totalorder %s24, 1
    %p343 = por %p341, %p342
    %p344 = scmp.ne.s32.totalorder %s333, %s334
    %p345 = scmp.eq.s32.totalorder %s24, 0
    %p346 = por %p344, %p345
    %p347 = scmp.ne.s32.totalorder %s333, %s334
    %p348 = scmp.eq.s32.totalorder %s25, 1
    %p349 = por %p347, %p348
    %p351 = scmp.ne.s32.totalorder %s334, %s350
    %p352 = scmp.eq.s32.totalorder %s25, 0
    %p353 = por %p351, %p352
    %p354 = scmp.le.s32.totalorder 1, %s19
    %p355 = scmp.lt.s32.totalorder %s19, 3
    %p356 = pnand %p354, %p355
    %p357 = pneg %p356
    // Predicated region
    $region9: #{crf_constituency_forward.2} parent=5 // pred_check
      _
    $region10: #{crf_constituency_forward.2} parent=5 // pred_check_branch
      %359 = sbr.rel (%p356) target = $region12
    $region11: #{crf_constituency_forward.2} parent=5 // pred_region
      %s360 = ssub.s32 %s19, 1
      // Predicated region
      $region13: #{crf_constituency_forward.2} parent=11 // pred_check
        %p361 = pneg %p108
      $region14: #{crf_constituency_forward.2} parent=11 // pred_check_branch
        %363 = sbr.rel (%p361) target = $region16
      $region15: #{crf_constituency_forward.2} parent=11 // pred_region
        _
      $region16: #{crf_constituency_forward.2} parent=11 // pred_fallthru
        _
      // Predicated region
      $region17: #{crf_constituency_forward.2} parent=11 // pred_check
        %p364 = pneg %p129
      $region18: #{crf_constituency_forward.2} parent=11 // pred_check_branch
        %366 = sbr.rel (%p364) target = $region20
      $region19: #{crf_constituency_forward.2} parent=11 // pred_region
        _
      $region20: #{crf_constituency_forward.2} parent=11 // pred_fallthru
        _
      // Predicated region
      $region21: #{crf_constituency_forward.2} parent=11 // pred_check
        %p367 = pneg %p150
      $region22: #{crf_constituency_forward.2} parent=11 // pred_check_branch
        %369 = sbr.rel (%p367) target = $region24
      $region23: #{crf_constituency_forward.2} parent=11 // pred_region
        _
      $region24: #{crf_constituency_forward.2} parent=11 // pred_fallthru
        _
      // Predicated region
      $region25: #{crf_constituency_forward.2} parent=11 // pred_check
        %p370 = pneg %p171
      $region26: #{crf_constituency_forward.2} parent=11 // pred_check_branch
        %372 = sbr.rel (%p370) target = $region28
      $region27: #{crf_constituency_forward.2} parent=11 // pred_region
        _
      $region28: #{crf_constituency_forward.2} parent=11 // pred_fallthru
        _
      // Predicated region
      $region29: #{crf_constituency_forward.2} parent=11 // pred_check
        %p373 = pneg %p192
      $region30: #{crf_constituency_forward.2} parent=11 // pred_check_branch
        %375 = sbr.rel (%p373) target = $region32
      $region31: #{crf_constituency_forward.2} parent=11 // pred_region
        _
      $region32: #{crf_constituency_forward.2} parent=11 // pred_fallthru
        _
      // Predicated region
      $region33: #{crf_constituency_forward.2} parent=11 // pred_check
        %p376 = pneg %p213
      $region34: #{crf_constituency_forward.2} parent=11 // pred_check_branch
        %378 = sbr.rel (%p376) target = $region36
      $region35: #{crf_constituency_forward.2} parent=11 // pred_region
        _
      $region36: #{crf_constituency_forward.2} parent=11 // pred_fallthru
        _
      // Predicated region
      $region37: #{crf_constituency_forward.2} parent=11 // pred_check
        %p379 = pneg %p234
      $region38: #{crf_constituency_forward.2} parent=11 // pred_check_branch
        %381 = sbr.rel (%p379) target = $region40
      $region39: #{crf_constituency_forward.2} parent=11 // pred_region
        _
      $region40: #{crf_constituency_forward.2} parent=11 // pred_fallthru
        _
    $region12: #{crf_constituency_forward.2} parent=5 // pred_fallthru
      _
    %p382 = scmp.lt.s32.totalorder %s19, 2
    // Predicated region
    $region41: #{crf_constituency_forward.2} parent=5 // pred_check
      %p383 = pneg %p382
    $region42: #{crf_constituency_forward.2} parent=5 // pred_check_branch
      %385 = sbr.rel (%p383) target = $region44
    $region43: #{crf_constituency_forward.2} parent=5 // pred_region
      // Predicated region
      $region45: #{crf_constituency_forward.2} parent=43 // pred_check
        %p386 = pneg %p53
      $region46: #{crf_constituency_forward.2} parent=43 // pred_check_branch
        %388 = sbr.rel (%p386) target = $region48
      $region47: #{crf_constituency_forward.2} parent=43 // pred_region
        %p389 = scmp.lt.s32.totalorder %s26, 1
        %s390 = scalar_select %p389, %s26, 1
        %p391 = scmp.lt.s32.totalorder %s27, 0
        %s392 = scalar_select %p391, %s27, 0
        %s393 = sadd.s32 %s392, %s390
        %s394 = smul.addr %s393, 8
        %s395 = scalar_lea.vmem %s0, %s394
      $region48: #{crf_constituency_forward.2} parent=43 // pred_fallthru
        _
      // Predicated region
      $region49: #{crf_constituency_forward.2} parent=43 // pred_check
        %p396 = pneg %p81
      $region50: #{crf_constituency_forward.2} parent=43 // pred_check_branch
        %398 = sbr.rel (%p396) target = $region52
      $region51: #{crf_constituency_forward.2} parent=43 // pred_region
        %p399 = scmp.lt.s32.totalorder %s26, 1
        %s400 = scalar_select %p399, %s26, 1
        %p401 = scmp.lt.s32.totalorder %s27, 0
        %s402 = scalar_select %p401, %s27, 0
        %s403 = sadd.s32 %s402, %s400
        %s404 = smul.addr %s403, 8
        %s405 = scalar_lea.vmem %s1, %s404
      $region52: #{crf_constituency_forward.2} parent=43 // pred_fallthru
        _
    $region44: #{crf_constituency_forward.2} parent=5 // pred_fallthru
      _
    %p406 = scmp.le.s32.totalorder 1, %s19
    %p407 = scmp.lt.s32.totalorder %s19, 3
    %p408 = pnand %p406, %p407
    %p409 = pneg %p408
    // Predicated region
    $region53: #{crf_constituency_forward.2} parent=5 // pred_check
      _
    $region54: #{crf_constituency_forward.2} parent=5 // pred_check_branch
      %411 = sbr.rel (%p408) target = $region56
    $region55: #{crf_constituency_forward.2} parent=5 // pred_region
      %s412 = ssub.s32 %s19, 1
      %p413 = scmp.lt.s32.totalorder %s28, 1
      %s414 = scalar_select %p413, %s28, 1
      %p415 = scmp.lt.s32.totalorder %s29, 0
      %s416 = scalar_select %p415, %s29, 0
      %s417 = sadd.s32 %s416, %s414
      %s418 = smul.addr %s417, 8
      %s419 = scalar_lea.vmem %s0, %s418
      %p420 = pneg %p59
      %p421 = pneg %p56
      %p422 = scmp.lt.s32.totalorder %s28, 1
      %s423 = scalar_select %p422, %s28, 1
      %p424 = scmp.lt.s32.totalorder %s29, 0
      %s425 = scalar_select %p424, %s29, 0
      %s426 = sadd.s32 %s425, %s423
      %s427 = smul.addr %s426, 8
      %s428 = scalar_lea.vmem %s1, %s427
      %p429 = pneg %p87
      %p430 = pneg %p84
      %p431 = pneg %p108
      %p432 = pneg %p105
      %p433 = pneg %p129
      %p434 = pneg %p126
      %p435 = pneg %p150
      %p436 = pneg %p147
      %p437 = pneg %p171
      %p438 = pneg %p168
      %p439 = pneg %p192
      %p440 = pneg %p189
      %p441 = pneg %p213
      %p442 = pneg %p210
      %p443 = pneg %p234
      %p444 = pneg %p231
      %p445 = pneg %p262
      %p446 = pneg %p259
      %p447 = scmp.lt.s32.totalorder %s28, 1
      %s448 = scalar_select %p447, %s28, 1
      %p449 = scmp.lt.s32.totalorder %s29, 0
      %s450 = scalar_select %p449, %s29, 0
      %s451 = sadd.s32 %s450, %s448
      %s452 = smul.addr %s451, 8
      %s453 = scalar_lea.vmem %s9, %s452
      %p454 = pneg %p290
      %p455 = pneg %p287
      %p456 = scmp.lt.s32.totalorder %s28, 1
      %s457 = scalar_select %p456, %s28, 1
      %p458 = scmp.lt.s32.totalorder %s29, 0
      %s459 = scalar_select %p458, %s29, 0
      %s460 = sadd.s32 %s459, %s457
      %s461 = smul.addr %s460, 8
      %s462 = scalar_lea.vmem %s10, %s461
      %p463 = pneg %p318
      %p464 = pneg %p315
      %p465 = scmp.lt.s32.totalorder %s28, 1
      %s466 = scalar_select %p465, %s28, 1
      %p467 = scmp.lt.s32.totalorder %s29, 0
      %s468 = scalar_select %p467, %s29, 0
      %s469 = sadd.s32 %s468, %s466
      %s470 = smul.addr %s469, 8
      %s471 = scalar_lea.vmem %s11, %s470
      %p472 = pneg %p346
      %p473 = pneg %p343
      %p474 = scmp.lt.s32.totalorder %s28, 1
      %s475 = scalar_select %p474, %s28, 1
      %p476 = scmp.lt.s32.totalorder %s29, 0
      %s477 = scalar_select %p476, %s29, 0
      %s478 = smul.addr %s477, 8
      %s479 = smul.addr %s475, 8
      %s480 = sadd.s32 %s478, %s479
      %s481 = smul.addr %s480, 8
      %s482 = scalar_lea.vmem %s12, %s481
      %p483 = scmp.lt.s32.totalorder %s28, 1
      %s484 = scalar_select %p483, %s28, 1
      %p485 = scmp.lt.s32.totalorder %s29, 0
      %s486 = scalar_select %p485, %s29, 0
      %s487 = sadd.s32 %s486, %s484
      %s488 = smul.addr %s487, 8
      %s489 = scalar_lea.vmem %s0, %s488
      %p490 = scmp.lt.s32.totalorder %s28, 1
      %s491 = scalar_select %p490, %s28, 1
      %p492 = scmp.lt.s32.totalorder %s29, 0
      %s493 = scalar_select %p492, %s29, 0
      %s494 = sadd.s32 %s493, %s491
      %s495 = smul.addr %s494, 8
      %s496 = scalar_lea.vmem %s1, %s495
      %p497 = scmp.lt.s32.totalorder %s28, 1
      %s498 = scalar_select %p497, %s28, 1
      %p499 = scmp.lt.s32.totalorder %s29, 0
      %s500 = scalar_select %p499, %s29, 0
      %s501 = sadd.s32 %s500, %s498
      %s502 = smul.addr %s501, 8
      %s503 = scalar_lea.vmem %s9, %s502
      %p504 = scmp.lt.s32.totalorder %s28, 1
      %s505 = scalar_select %p504, %s28, 1
      %p506 = scmp.lt.s32.totalorder %s29, 0
      %s507 = scalar_select %p506, %s29, 0
      %s508 = sadd.s32 %s507, %s505
      %s509 = smul.addr %s508, 8
      %s510 = scalar_lea.vmem %s10, %s509
      %p511 = scmp.lt.s32.totalorder %s28, 1
      %s512 = scalar_select %p511, %s28, 1
      %p513 = scmp.lt.s32.totalorder %s29, 0
      %s514 = scalar_select %p513, %s29, 0
      %s515 = sadd.s32 %s514, %s512
      %s516 = smul.addr %s515, 8
      %s517 = scalar_lea.vmem %s11, %s516
      %p518 = scmp.lt.s32.totalorder %s28, 1
      %s519 = scalar_select %p518, %s28, 1
      %p520 = scmp.lt.s32.totalorder %s29, 0
      %s521 = scalar_select %p520, %s29, 0
      %s522 = smul.addr %s521, 8
      %s523 = smul.addr %s519, 8
      %s524 = sadd.s32 %s522, %s523
      %s525 = smul.addr %s524, 8
      %s526 = scalar_lea.vmem %s12, %s525
      %v527 = vld [vmem:[%s489] sm:$0x7f]
      %v528 = vld [vmem:[%s496] sm:$0x7f]
      %v529 = vld [vmem:[%s2] sm:$0xff]
      %v530 = vld [vmem:[%s2 + $0x8] sm:$0xff]
      %v531 = vld [vmem:[%s2 + $0x10] sm:$0xff]
      %v532 = vld [vmem:[%s2 + $0x18] sm:$0xff]
      %v533 = vld [vmem:[%s2 + $0x20] sm:$0xff]
      %v534 = vld [vmem:[%s2 + $0x28] sm:$0xff]
      %v535 = vld [vmem:[%s2 + $0x30] sm:$0xff]
      %v536 = vld [vmem:[%s2 + $0x38] sm:$0xff]
      %v537 = vld [vmem:[%s3] sm:$0xff]
      %v538 = vld [vmem:[%s3 + $0x8] sm:$0xff]
      %v539 = vld [vmem:[%s3 + $0x10] sm:$0xff]
      %v540 = vld [vmem:[%s3 + $0x18] sm:$0xff]
      %v541 = vld [vmem:[%s3 + $0x20] sm:$0xff]
      %v542 = vld [vmem:[%s3 + $0x28] sm:$0xff]
      %v543 = vld [vmem:[%s3 + $0x30] sm:$0xff]
      %v544 = vld [vmem:[%s3 + $0x38] sm:$0xff]
      %vm545 = vcmask 130048
      %v547 = vsel %vm545, %v528, 0
      %549 = vmatpush.msra.mxu0 0.0
      %550 = vmatpush.msra.mxu0 0.0
      %551 = vmatpush.msra.mxu0 0.0
      %552 = vmatpush.msra.mxu0 0.0
      %553 = vmatpush.msra.mxu0 0.0
      %554 = vmatpush.msra.mxu0 0.0
      %555 = vmatpush.msra.mxu0 0.0
      %556 = vmatpush.msra.mxu0 0.0
      %557 = vmatpush.msra.mxu0 0.0
      %558 = vmatpush.msra.mxu0 0.0
      %559 = vmatpush.msra.mxu0 0.0
      %560 = vmatpush.msra.mxu0 0.0
      %561 = vmatpush.msra.mxu0 0.0
      %562 = vmatpush.msra.mxu0 0.0
      %563 = vmatpush.msra.mxu0 %v541
      %564 = vmatpush.msra.mxu0 %v537
      %565 = vmatmul.f32.gmra.mxu0 %v547
      %v566 = vpop.f32.mrf.mxu0
      %v567 = vadd.f32 0.0, %v566
      %568 = vdwg.mxu0
      %569 = vmatpush.msra.mxu0 0.0
      %570 = vmatpush.msra.mxu0 0.0
      %571 = vmatpush.msra.mxu0 0.0
      %572 = vmatpush.msra.mxu0 0.0
      %573 = vmatpush.msra.mxu0 0.0
      %574 = vmatpush.msra.mxu0 0.0
      %575 = vmatpush.msra.mxu0 0.0
      %576 = vmatpush.msra.mxu0 0.0
      %577 = vmatpush.msra.mxu0 0.0
      %578 = vmatpush.msra.mxu0 0.0
      %579 = vmatpush.msra.mxu0 0.0
      %580 = vmatpush.msra.mxu0 0.0
      %581 = vmatpush.msra.mxu0 0.0
      %582 = vmatpush.msra.mxu0 0.0
      %583 = vmatpush.msra.mxu0 %v542
      %584 = vmatpush.msra.mxu0 %v538
      %585 = vmatmul.f32.gmra.mxu0 %v547
      %v586 = vpop.f32.mrf.mxu0
      %v587 = vadd.f32 0.0, %v586
      %588 = vdwg.mxu0
      %589 = vmatpush.msra.mxu0 0.0
      %590 = vmatpush.msra.mxu0 0.0
      %591 = vmatpush.msra.mxu0 0.0
      %592 = vmatpush.msra.mxu0 0.0
      %593 = vmatpush.msra.mxu0 0.0
      %594 = vmatpush.msra.mxu0 0.0
      %595 = vmatpush.msra.mxu0 0.0
      %596 = vmatpush.msra.mxu0 0.0
      %597 = vmatpush.msra.mxu0 0.0
      %598 = vmatpush.msra.mxu0 0.0
      %599 = vmatpush.msra.mxu0 0.0
      %600 = vmatpush.msra.mxu0 0.0
      %601 = vmatpush.msra.mxu0 0.0
      %602 = vmatpush.msra.mxu0 0.0
      %603 = vmatpush.msra.mxu0 %v543
      %604 = vmatpush.msra.mxu0 %v539
      %605 = vmatmul.f32.gmra.mxu0 %v547
      %v606 = vpop.f32.mrf.mxu0
      %v607 = vadd.f32 0.0, %v606
      %608 = vdwg.mxu0
      %609 = vmatpush.msra.mxu0 0.0
      %610 = vmatpush.msra.mxu0 0.0
      %611 = vmatpush.msra.mxu0 0.0
      %612 = vmatpush.msra.mxu0 0.0
      %613 = vmatpush.msra.mxu0 0.0
      %614 = vmatpush.msra.mxu0 0.0
      %615 = vmatpush.msra.mxu0 0.0
      %616 = vmatpush.msra.mxu0 0.0
      %617 = vmatpush.msra.mxu0 0.0
      %618 = vmatpush.msra.mxu0 0.0
      %619 = vmatpush.msra.mxu0 0.0
      %620 = vmatpush.msra.mxu0 0.0
      %621 = vmatpush.msra.mxu0 0.0
      %622 = vmatpush.msra.mxu0 0.0
      %623 = vmatpush.msra.mxu0 %v544
      %624 = vmatpush.msra.mxu0 %v540
      %625 = vmatmul.f32.gmra.mxu0 %v547
      %v626 = vpop.f32.mrf.mxu0
      %v627 = vadd.f32 0.0, %v626
      %628 = vdwg.mxu0
      %v630 = vsel %vm545, %v527, 0
      %632 = vmatpush.msra.mxu0 0.0
      %633 = vmatpush.msra.mxu0 0.0
      %634 = vmatpush.msra.mxu0 0.0
      %635 = vmatpush.msra.mxu0 0.0
      %636 = vmatpush.msra.mxu0 0.0
      %637 = vmatpush.msra.mxu0 0.0
      %638 = vmatpush.msra.mxu0 0.0
      %639 = vmatpush.msra.mxu0 0.0
      %640 = vmatpush.msra.mxu0 0.0
      %641 = vmatpush.msra.mxu0 0.0
      %642 = vmatpush.msra.mxu0 0.0
      %643 = vmatpush.msra.mxu0 0.0
      %644 = vmatpush.msra.mxu0 0.0
      %645 = vmatpush.msra.mxu0 0.0
      %646 = vmatpush.msra.mxu0 %v533
      %647 = vmatpush.msra.mxu0 %v529
      %648 = vmatmul.f32.gmra.mxu0 %v630
      %v649 = vpop.f32.mrf.mxu0
      %v650 = vadd.f32 %v567, %v649
      %651 = vdwg.mxu0
      %652 = vmatpush.msra.mxu0 0.0
      %653 = vmatpush.msra.mxu0 0.0
      %654 = vmatpush.msra.mxu0 0.0
      %655 = vmatpush.msra.mxu0 0.0
      %656 = vmatpush.msra.mxu0 0.0
      %657 = vmatpush.msra.mxu0 0.0
      %658 = vmatpush.msra.mxu0 0.0
      %659 = vmatpush.msra.mxu0 0.0
      %660 = vmatpush.msra.mxu0 0.0
      %661 = vmatpush.msra.mxu0 0.0
      %662 = vmatpush.msra.mxu0 0.0
      %663 = vmatpush.msra.mxu0 0.0
      %664 = vmatpush.msra.mxu0 0.0
      %665 = vmatpush.msra.mxu0 0.0
      %666 = vmatpush.msra.mxu0 %v534
      %667 = vmatpush.msra.mxu0 %v530
      %668 = vmatmul.f32.gmra.mxu0 %v630
      %v669 = vpop.f32.mrf.mxu0
      %v670 = vadd.f32 %v587, %v669
      %671 = vdwg.mxu0
      %672 = vmatpush.msra.mxu0 0.0
      %673 = vmatpush.msra.mxu0 0.0
      %674 = vmatpush.msra.mxu0 0.0
      %675 = vmatpush.msra.mxu0 0.0
      %676 = vmatpush.msra.mxu0 0.0
      %677 = vmatpush.msra.mxu0 0.0
      %678 = vmatpush.msra.mxu0 0.0
      %679 = vmatpush.msra.mxu0 0.0
      %680 = vmatpush.msra.mxu0 0.0
      %681 = vmatpush.msra.mxu0 0.0
      %682 = vmatpush.msra.mxu0 0.0
      %683 = vmatpush.msra.mxu0 0.0
      %684 = vmatpush.msra.mxu0 0.0
      %685 = vmatpush.msra.mxu0 0.0
      %686 = vmatpush.msra.mxu0 %v535
      %687 = vmatpush.msra.mxu0 %v531
      %688 = vmatmul.f32.gmra.mxu0 %v630
      %v689 = vpop.f32.mrf.mxu0
      %v690 = vadd.f32 %v607, %v689
      %691 = vdwg.mxu0
      %692 = vmatpush.msra.mxu0 0.0
      %693 = vmatpush.msra.mxu0 0.0
      %694 = vmatpush.msra.mxu0 0.0
      %695 = vmatpush.msra.mxu0 0.0
      %696 = vmatpush.msra.mxu0 0.0
      %697 = vmatpush.msra.mxu0 0.0
      %698 = vmatpush.msra.mxu0 0.0
      %699 = vmatpush.msra.mxu0 0.0
      %700 = vmatpush.msra.mxu0 0.0
      %701 = vmatpush.msra.mxu0 0.0
      %702 = vmatpush.msra.mxu0 0.0
      %703 = vmatpush.msra.mxu0 0.0
      %704 = vmatpush.msra.mxu0 0.0
      %705 = vmatpush.msra.mxu0 0.0
      %706 = vmatpush.msra.mxu0 %v536
      %707 = vmatpush.msra.mxu0 %v532
      %708 = vmatmul.f32.gmra.mxu0 %v630
      %v709 = vpop.f32.mrf.mxu0
      %v710 = vadd.f32 %v627, %v709
      %711 = vdwg.mxu0
      %v712 = vld [vmem:[%s4] sm:$0xf]
      %v714 = vperm.slane %v712, 0
      %v715 = vperm.slane %v712, 1
      %v716 = vperm.slane %v712, 2
      %v717 = vperm.slane %v712, 3
      %v722 = vadd.f32 %v650, %v714
      %v723 = vadd.f32 %v670, %v715
      %v724 = vadd.f32 %v690, %v716
      %v725 = vadd.f32 %v710, %v717
      %vm726 = vcmp.ge.f32.partialorder %v722, 0.0
      %vm727 = vcmp.ge.f32.partialorder %v723, 0.0
      %vm728 = vcmp.ge.f32.partialorder %v724, 0.0
      %vm729 = vcmp.ge.f32.partialorder %v725, 0.0
      %v730 = vmul.f32 %v722, 0.1
      %v731 = vmul.f32 %v723, 0.1
      %v732 = vmul.f32 %v724, 0.1
      %v733 = vmul.f32 %v725, 0.1
      %v734 = vsel %vm726, %v722, %v730
      %v735 = vsel %vm727, %v723, %v731
      %v736 = vsel %vm728, %v724, %v732
      %v737 = vsel %vm729, %v725, %v733
      %738 = vst [vmem:[%s510] sm:$0x7f] %v735
      %739 = vst [vmem:[%s517] sm:$0x7f] %v737
      %v740 = vld [vmem:[%s5] sm:$0xff]
      %v741 = vld [vmem:[%s5 + $0x8] sm:$0xff]
      %v742 = vld [vmem:[%s5 + $0x10] sm:$0xff]
      %v743 = vld [vmem:[%s5 + $0x18] sm:$0xff]
      %v744 = vld [vmem:[%s5 + $0x20] sm:$0xff]
      %v745 = vld [vmem:[%s5 + $0x28] sm:$0xff]
      %v746 = vld [vmem:[%s5 + $0x30] sm:$0xff]
      %v747 = vld [vmem:[%s5 + $0x38] sm:$0xff]
      %v748 = vld [vmem:[%s5 + $0x40] sm:$0xff]
      %v749 = vld [vmem:[%s5 + $0x48] sm:$0xff]
      %v750 = vld [vmem:[%s5 + $0x50] sm:$0xff]
      %v751 = vld [vmem:[%s5 + $0x58] sm:$0xff]
      %v752 = vld [vmem:[%s5 + $0x60] sm:$0xff]
      %v753 = vld [vmem:[%s5 + $0x68] sm:$0xff]
      %v754 = vld [vmem:[%s5 + $0x70] sm:$0xff]
      %v755 = vld [vmem:[%s5 + $0x78] sm:$0xff]
      %v756 = vld [vmem:[%s6] sm:$0x1]
      %v758 = vperm.slane %v756, 0
      %760 = vmatpush.msra.mxu0 %v755
      %761 = vmatpush.msra.mxu0 %v754
      %762 = vmatpush.msra.mxu0 %v753
      %763 = vmatpush.msra.mxu0 %v752
      %764 = vmatpush.msra.mxu0 %v751
      %765 = vmatpush.msra.mxu0 %v750
      %766 = vmatpush.msra.mxu0 %v749
      %767 = vmatpush.msra.mxu0 %v748
      %768 = vmatpush.msra.mxu0 %v747
      %769 = vmatpush.msra.mxu0 %v746
      %770 = vmatpush.msra.mxu0 %v745
      %771 = vmatpush.msra.mxu0 %v744
      %772 = vmatpush.msra.mxu0 %v743
      %773 = vmatpush.msra.mxu0 %v742
      %774 = vmatpush.msra.mxu0 %v741
      %775 = vmatpush.msra.mxu0 %v740
      %776 = vmatmul.f32.gmra.mxu0 %v734
      %v777 = vpop.f32.mrf.mxu0
      %v778 = vadd.f32 %v758, %v777
      %779 = vdwg.mxu0
      %780 = vst [vmem:[%s503] sm:$0x7f] %v778
      %v781 = vld [vmem:[%s7] sm:$0xff]
      %v782 = vld [vmem:[%s7 + $0x8] sm:$0xff]
      %v783 = vld [vmem:[%s7 + $0x10] sm:$0xff]
      %v784 = vld [vmem:[%s7 + $0x18] sm:$0xff]
      %v785 = vld [vmem:[%s7 + $0x20] sm:$0xff]
      %v786 = vld [vmem:[%s7 + $0x28] sm:$0xff]
      %v787 = vld [vmem:[%s7 + $0x30] sm:$0xff]
      %v788 = vld [vmem:[%s7 + $0x38] sm:$0xff]
      %v789 = vld [vmem:[%s7 + $0x40] sm:$0xff]
      %v790 = vld [vmem:[%s7 + $0x48] sm:$0xff]
      %v791 = vld [vmem:[%s7 + $0x50] sm:$0xff]
      %v792 = vld [vmem:[%s7 + $0x58] sm:$0xff]
      %v793 = vld [vmem:[%s7 + $0x60] sm:$0xff]
      %v794 = vld [vmem:[%s7 + $0x68] sm:$0xff]
      %v795 = vld [vmem:[%s7 + $0x70] sm:$0xff]
      %v796 = vld [vmem:[%s7 + $0x78] sm:$0xff]
      %v797 = vld [vmem:[%s7 + $0x80] sm:$0xff]
      %v798 = vld [vmem:[%s7 + $0x88] sm:$0xff]
      %v799 = vld [vmem:[%s7 + $0x90] sm:$0xff]
      %v800 = vld [vmem:[%s7 + $0x98] sm:$0xff]
      %v801 = vld [vmem:[%s7 + $0xa0] sm:$0xff]
      %v802 = vld [vmem:[%s7 + $0xa8] sm:$0xff]
      %v803 = vld [vmem:[%s7 + $0xb0] sm:$0xff]
      %v804 = vld [vmem:[%s7 + $0xb8] sm:$0xff]
      %v805 = vld [vmem:[%s7 + $0xc0] sm:$0xff]
      %v806 = vld [vmem:[%s7 + $0xc8] sm:$0xff]
      %v807 = vld [vmem:[%s7 + $0xd0] sm:$0xff]
      %v808 = vld [vmem:[%s7 + $0xd8] sm:$0xff]
      %v809 = vld [vmem:[%s7 + $0xe0] sm:$0xff]
      %v810 = vld [vmem:[%s7 + $0xe8] sm:$0xff]
      %v811 = vld [vmem:[%s7 + $0xf0] sm:$0xff]
      %v812 = vld [vmem:[%s7 + $0xf8] sm:$0xff]
      %v813 = vld [vmem:[%s7 + $0x100] sm:$0xff]
      %v814 = vld [vmem:[%s7 + $0x108] sm:$0xff]
      %v815 = vld [vmem:[%s7 + $0x110] sm:$0xff]
      %v816 = vld [vmem:[%s7 + $0x118] sm:$0xff]
      %v817 = vld [vmem:[%s7 + $0x120] sm:$0xff]
      %v818 = vld [vmem:[%s7 + $0x128] sm:$0xff]
      %v819 = vld [vmem:[%s7 + $0x130] sm:$0xff]
      %v820 = vld [vmem:[%s7 + $0x138] sm:$0xff]
      %v821 = vld [vmem:[%s7 + $0x140] sm:$0xff]
      %v822 = vld [vmem:[%s7 + $0x148] sm:$0xff]
      %v823 = vld [vmem:[%s7 + $0x150] sm:$0xff]
      %v824 = vld [vmem:[%s7 + $0x158] sm:$0xff]
      %v825 = vld [vmem:[%s7 + $0x160] sm:$0xff]
      %v826 = vld [vmem:[%s7 + $0x168] sm:$0xff]
      %v827 = vld [vmem:[%s7 + $0x170] sm:$0xff]
      %v828 = vld [vmem:[%s7 + $0x178] sm:$0xff]
      %v829 = vld [vmem:[%s7 + $0x180] sm:$0xff]
      %v830 = vld [vmem:[%s7 + $0x188] sm:$0xff]
      %v831 = vld [vmem:[%s7 + $0x190] sm:$0xff]
      %v832 = vld [vmem:[%s7 + $0x198] sm:$0xff]
      %v833 = vld [vmem:[%s7 + $0x1a0] sm:$0xff]
      %v834 = vld [vmem:[%s7 + $0x1a8] sm:$0xff]
      %v835 = vld [vmem:[%s7 + $0x1b0] sm:$0xff]
      %v836 = vld [vmem:[%s7 + $0x1b8] sm:$0xff]
      %v837 = vld [vmem:[%s7 + $0x1c0] sm:$0xff]
      %v838 = vld [vmem:[%s7 + $0x1c8] sm:$0xff]
      %v839 = vld [vmem:[%s7 + $0x1d0] sm:$0xff]
      %v840 = vld [vmem:[%s7 + $0x1d8] sm:$0xff]
      %v841 = vld [vmem:[%s7 + $0x1e0] sm:$0xff]
      %v842 = vld [vmem:[%s7 + $0x1e8] sm:$0xff]
      %v843 = vld [vmem:[%s7 + $0x1f0] sm:$0xff]
      %v844 = vld [vmem:[%s7 + $0x1f8] sm:$0xff]
      %v845 = vld [vmem:[%s7 + $0x200] sm:$0xff]
      %v846 = vld [vmem:[%s7 + $0x208] sm:$0xff]
      %v847 = vld [vmem:[%s7 + $0x210] sm:$0xff]
      %v848 = vld [vmem:[%s7 + $0x218] sm:$0xff]
      %v849 = vld [vmem:[%s7 + $0x220] sm:$0xff]
      %v850 = vld [vmem:[%s7 + $0x228] sm:$0xff]
      %v851 = vld [vmem:[%s7 + $0x230] sm:$0xff]
      %v852 = vld [vmem:[%s7 + $0x238] sm:$0xff]
      %v853 = vld [vmem:[%s7 + $0x240] sm:$0xff]
      %v854 = vld [vmem:[%s7 + $0x248] sm:$0xff]
      %v855 = vld [vmem:[%s7 + $0x250] sm:$0xff]
      %v856 = vld [vmem:[%s7 + $0x258] sm:$0xff]
      %v857 = vld [vmem:[%s7 + $0x260] sm:$0xff]
      %v858 = vld [vmem:[%s7 + $0x268] sm:$0xff]
      %v859 = vld [vmem:[%s7 + $0x270] sm:$0xff]
      %v860 = vld [vmem:[%s7 + $0x278] sm:$0xff]
      %v861 = vld [vmem:[%s7 + $0x280] sm:$0xff]
      %v862 = vld [vmem:[%s7 + $0x288] sm:$0xff]
      %v863 = vld [vmem:[%s7 + $0x290] sm:$0xff]
      %v864 = vld [vmem:[%s7 + $0x298] sm:$0xff]
      %v865 = vld [vmem:[%s7 + $0x2a0] sm:$0xff]
      %v866 = vld [vmem:[%s7 + $0x2a8] sm:$0xff]
      %v867 = vld [vmem:[%s7 + $0x2b0] sm:$0xff]
      %v868 = vld [vmem:[%s7 + $0x2b8] sm:$0xff]
      %v869 = vld [vmem:[%s7 + $0x2c0] sm:$0xff]
      %v870 = vld [vmem:[%s7 + $0x2c8] sm:$0xff]
      %v871 = vld [vmem:[%s7 + $0x2d0] sm:$0xff]
      %v872 = vld [vmem:[%s7 + $0x2d8] sm:$0xff]
      %v873 = vld [vmem:[%s7 + $0x2e0] sm:$0xff]
      %v874 = vld [vmem:[%s7 + $0x2e8] sm:$0xff]
      %v875 = vld [vmem:[%s7 + $0x2f0] sm:$0xff]
      %v876 = vld [vmem:[%s7 + $0x2f8] sm:$0xff]
      %v877 = vld [vmem:[%s7 + $0x300] sm:$0xff]
      %v878 = vld [vmem:[%s7 + $0x308] sm:$0xff]
      %v879 = vld [vmem:[%s7 + $0x310] sm:$0xff]
      %v880 = vld [vmem:[%s7 + $0x318] sm:$0xff]
      %v881 = vld [vmem:[%s7 + $0x320] sm:$0xff]
      %v882 = vld [vmem:[%s7 + $0x328] sm:$0xff]
      %v883 = vld [vmem:[%s7 + $0x330] sm:$0xff]
      %v884 = vld [vmem:[%s7 + $0x338] sm:$0xff]
      %v885 = vld [vmem:[%s7 + $0x340] sm:$0xff]
      %v886 = vld [vmem:[%s7 + $0x348] sm:$0xff]
      %v887 = vld [vmem:[%s7 + $0x350] sm:$0xff]
      %v888 = vld [vmem:[%s7 + $0x358] sm:$0xff]
      %v889 = vld [vmem:[%s7 + $0x360] sm:$0xff]
      %v890 = vld [vmem:[%s7 + $0x368] sm:$0xff]
      %v891 = vld [vmem:[%s7 + $0x370] sm:$0xff]
      %v892 = vld [vmem:[%s7 + $0x378] sm:$0xff]
      %v893 = vld [vmem:[%s7 + $0x380] sm:$0xff]
      %v894 = vld [vmem:[%s7 + $0x388] sm:$0xff]
      %v895 = vld [vmem:[%s7 + $0x390] sm:$0xff]
      %v896 = vld [vmem:[%s7 + $0x398] sm:$0xff]
      %v897 = vld [vmem:[%s7 + $0x3a0] sm:$0xff]
      %v898 = vld [vmem:[%s7 + $0x3a8] sm:$0xff]
      %v899 = vld [vmem:[%s7 + $0x3b0] sm:$0xff]
      %v900 = vld [vmem:[%s7 + $0x3b8] sm:$0xff]
      %v901 = vld [vmem:[%s7 + $0x3c0] sm:$0xff]
      %v902 = vld [vmem:[%s7 + $0x3c8] sm:$0xff]
      %v903 = vld [vmem:[%s7 + $0x3d0] sm:$0xff]
      %v904 = vld [vmem:[%s7 + $0x3d8] sm:$0xff]
      %v905 = vld [vmem:[%s7 + $0x3e0] sm:$0xff]
      %v906 = vld [vmem:[%s7 + $0x3e8] sm:$0xff]
      %v907 = vld [vmem:[%s7 + $0x3f0] sm:$0xff]
      %v908 = vld [vmem:[%s7 + $0x3f8] sm:$0xff]
      %v909 = vld [vmem:[%s8] sm:$0xff]
      %v911 = vperm.slane %v909, 0
      %v912 = vperm.slane %v909, 1
      %v913 = vperm.slane %v909, 2
      %v914 = vperm.slane %v909, 3
      %v915 = vperm.slane %v909, 4
      %v916 = vperm.slane %v909, 5
      %v917 = vperm.slane %v909, 6
      %v918 = vperm.slane %v909, 7
      %927 = vmatpush.msra.mxu0 %v901
      %928 = vmatpush.msra.mxu0 %v893
      %929 = vmatpush.msra.mxu0 %v885
      %930 = vmatpush.msra.mxu0 %v877
      %931 = vmatpush.msra.mxu0 %v869
      %932 = vmatpush.msra.mxu0 %v861
      %933 = vmatpush.msra.mxu0 %v853
      %934 = vmatpush.msra.mxu0 %v845
      %935 = vmatpush.msra.mxu0 %v837
      %936 = vmatpush.msra.mxu0 %v829
      %937 = vmatpush.msra.mxu0 %v821
      %938 = vmatpush.msra.mxu0 %v813
      %939 = vmatpush.msra.mxu0 %v805
      %940 = vmatpush.msra.mxu0 %v797
      %941 = vmatpush.msra.mxu0 %v789
      %942 = vmatpush.msra.mxu0 %v781
      %943 = vmatmul.f32.gmra.mxu0 %v736
      %v944 = vpop.f32.mrf.mxu0
      %v945 = vadd.f32 %v911, %v944
      %946 = vdwg.mxu0
      %947 = vmatpush.msra.mxu0 %v902
      %948 = vmatpush.msra.mxu0 %v894
      %949 = vmatpush.msra.mxu0 %v886
      %950 = vmatpush.msra.mxu0 %v878
      %951 = vmatpush.msra.mxu0 %v870
      %952 = vmatpush.msra.mxu0 %v862
      %953 = vmatpush.msra.mxu0 %v854
      %954 = vmatpush.msra.mxu0 %v846
      %955 = vmatpush.msra.mxu0 %v838
      %956 = vmatpush.msra.mxu0 %v830
      %957 = vmatpush.msra.mxu0 %v822
      %958 = vmatpush.msra.mxu0 %v814
      %959 = vmatpush.msra.mxu0 %v806
      %960 = vmatpush.msra.mxu0 %v798
      %961 = vmatpush.msra.mxu0 %v790
      %962 = vmatpush.msra.mxu0 %v782
      %963 = vmatmul.f32.gmra.mxu0 %v736
      %v964 = vpop.f32.mrf.mxu0
      %v965 = vadd.f32 %v912, %v964
      %966 = vdwg.mxu0
      %967 = vmatpush.msra.mxu0 %v903
      %968 = vmatpush.msra.mxu0 %v895
      %969 = vmatpush.msra.mxu0 %v887
      %970 = vmatpush.msra.mxu0 %v879
      %971 = vmatpush.msra.mxu0 %v871
      %972 = vmatpush.msra.mxu0 %v863
      %973 = vmatpush.msra.mxu0 %v855
      %974 = vmatpush.msra.mxu0 %v847
      %975 = vmatpush.msra.mxu0 %v839
      %976 = vmatpush.msra.mxu0 %v831
      %977 = vmatpush.msra.mxu0 %v823
      %978 = vmatpush.msra.mxu0 %v815
      %979 = vmatpush.msra.mxu0 %v807
      %980 = vmatpush.msra.mxu0 %v799
      %981 = vmatpush.msra.mxu0 %v791
      %982 = vmatpush.msra.mxu0 %v783
      %983 = vmatmul.f32.gmra.mxu0 %v736
      %v984 = vpop.f32.mrf.mxu0
      %v985 = vadd.f32 %v913, %v984
      %986 = vdwg.mxu0
      %987 = vmatpush.msra.mxu0 %v904
      %988 = vmatpush.msra.mxu0 %v896
      %989 = vmatpush.msra.mxu0 %v888
      %990 = vmatpush.msra.mxu0 %v880
      %991 = vmatpush.msra.mxu0 %v872
      %992 = vmatpush.msra.mxu0 %v864
      %993 = vmatpush.msra.mxu0 %v856
      %994 = vmatpush.msra.mxu0 %v848
      %995 = vmatpush.msra.mxu0 %v840
      %996 = vmatpush.msra.mxu0 %v832
      %997 = vmatpush.msra.mxu0 %v824
      %998 = vmatpush.msra.mxu0 %v816
      %999 = vmatpush.msra.mxu0 %v808
      %1000 = vmatpush.msra.mxu0 %v800
      %1001 = vmatpush.msra.mxu0 %v792
      %1002 = vmatpush.msra.mxu0 %v784
      %1003 = vmatmul.f32.gmra.mxu0 %v736
      %v1004 = vpop.f32.mrf.mxu0
      %v1005 = vadd.f32 %v914, %v1004
      %1006 = vdwg.mxu0
      %1007 = vmatpush.msra.mxu0 %v905
      %1008 = vmatpush.msra.mxu0 %v897
      %1009 = vmatpush.msra.mxu0 %v889
      %1010 = vmatpush.msra.mxu0 %v881
      %1011 = vmatpush.msra.mxu0 %v873
      %1012 = vmatpush.msra.mxu0 %v865
      %1013 = vmatpush.msra.mxu0 %v857
      %1014 = vmatpush.msra.mxu0 %v849
      %1015 = vmatpush.msra.mxu0 %v841
      %1016 = vmatpush.msra.mxu0 %v833
      %1017 = vmatpush.msra.mxu0 %v825
      %1018 = vmatpush.msra.mxu0 %v817
      %1019 = vmatpush.msra.mxu0 %v809
      %1020 = vmatpush.msra.mxu0 %v801
      %1021 = vmatpush.msra.mxu0 %v793
      %1022 = vmatpush.msra.mxu0 %v785
      %1023 = vmatmul.f32.gmra.mxu0 %v736
      %v1024 = vpop.f32.mrf.mxu0
      %v1025 = vadd.f32 %v915, %v1024
      %1026 = vdwg.mxu0
      %1027 = vmatpush.msra.mxu0 %v906
      %1028 = vmatpush.msra.mxu0 %v898
      %1029 = vmatpush.msra.mxu0 %v890
      %1030 = vmatpush.msra.mxu0 %v882
      %1031 = vmatpush.msra.mxu0 %v874
      %1032 = vmatpush.msra.mxu0 %v866
      %1033 = vmatpush.msra.mxu0 %v858
      %1034 = vmatpush.msra.mxu0 %v850
      %1035 = vmatpush.msra.mxu0 %v842
      %1036 = vmatpush.msra.mxu0 %v834
      %1037 = vmatpush.msra.mxu0 %v826
      %1038 = vmatpush.msra.mxu0 %v818
      %1039 = vmatpush.msra.mxu0 %v810
      %1040 = vmatpush.msra.mxu0 %v802
      %1041 = vmatpush.msra.mxu0 %v794
      %1042 = vmatpush.msra.mxu0 %v786
      %1043 = vmatmul.f32.gmra.mxu0 %v736
      %v1044 = vpop.f32.mrf.mxu0
      %v1045 = vadd.f32 %v916, %v1044
      %1046 = vdwg.mxu0
      %1047 = vmatpush.msra.mxu0 %v907
      %1048 = vmatpush.msra.mxu0 %v899
      %1049 = vmatpush.msra.mxu0 %v891
      %1050 = vmatpush.msra.mxu0 %v883
      %1051 = vmatpush.msra.mxu0 %v875
      %1052 = vmatpush.msra.mxu0 %v867
      %1053 = vmatpush.msra.mxu0 %v859
      %1054 = vmatpush.msra.mxu0 %v851
      %1055 = vmatpush.msra.mxu0 %v843
      %1056 = vmatpush.msra.mxu0 %v835
      %1057 = vmatpush.msra.mxu0 %v827
      %1058 = vmatpush.msra.mxu0 %v819
      %1059 = vmatpush.msra.mxu0 %v811
      %1060 = vmatpush.msra.mxu0 %v803
      %1061 = vmatpush.msra.mxu0 %v795
      %1062 = vmatpush.msra.mxu0 %v787
      %1063 = vmatmul.f32.gmra.mxu0 %v736
      %v1064 = vpop.f32.mrf.mxu0
      %v1065 = vadd.f32 %v917, %v1064
      %1066 = vdwg.mxu0
      %1067 = vmatpush.msra.mxu0 %v908
      %1068 = vmatpush.msra.mxu0 %v900
      %1069 = vmatpush.msra.mxu0 %v892
      %1070 = vmatpush.msra.mxu0 %v884
      %1071 = vmatpush.msra.mxu0 %v876
      %1072 = vmatpush.msra.mxu0 %v868
      %1073 = vmatpush.msra.mxu0 %v860
      %1074 = vmatpush.msra.mxu0 %v852
      %1075 = vmatpush.msra.mxu0 %v844
      %1076 = vmatpush.msra.mxu0 %v836
      %1077 = vmatpush.msra.mxu0 %v828
      %1078 = vmatpush.msra.mxu0 %v820
      %1079 = vmatpush.msra.mxu0 %v812
      %1080 = vmatpush.msra.mxu0 %v804
      %1081 = vmatpush.msra.mxu0 %v796
      %1082 = vmatpush.msra.mxu0 %v788
      %1083 = vmatmul.f32.gmra.mxu0 %v736
      %v1084 = vpop.f32.mrf.mxu0
      %v1085 = vadd.f32 %v918, %v1084
      %1086 = vdwg.mxu0
      %1087 = vst [vmem:[%s526] sm:$0x7f] %v945
      %1088 = vst [vmem:[%s526 + $0x8] sm:$0x7f] %v965
      %1089 = vst [vmem:[%s526 + $0x10] sm:$0x7f] %v985
      %1090 = vst [vmem:[%s526 + $0x18] sm:$0x7f] %v1005
      %1091 = vst [vmem:[%s526 + $0x20] sm:$0x7f] %v1025
      %1092 = vst [vmem:[%s526 + $0x28] sm:$0x7f] %v1045
      %1093 = vst [vmem:[%s526 + $0x30] sm:$0x7f] %v1065
      %1094 = vst [vmem:[%s526 + $0x38] sm:$0x7f] %v1085
      %p1095 = scmp.lt.s32.totalorder %s28, 1
      %s1096 = scalar_select %p1095, %s28, 1
      %p1097 = scmp.lt.s32.totalorder %s29, 0
      %s1098 = scalar_select %p1097, %s29, 0
      %s1099 = sadd.s32 %s1098, %s1096
      %s1100 = smul.addr %s1099, 8
      %s1101 = scalar_lea.vmem %s9, %s1100
      %p1102 = scmp.lt.s32.totalorder %s28, 1
      %s1103 = scalar_select %p1102, %s28, 1
      %p1104 = scmp.lt.s32.totalorder %s29, 0
      %s1105 = scalar_select %p1104, %s29, 0
      %s1106 = sadd.s32 %s1105, %s1103
      %s1107 = smul.addr %s1106, 8
      %s1108 = scalar_lea.vmem %s10, %s1107
      %p1109 = scmp.lt.s32.totalorder %s28, 1
      %s1110 = scalar_select %p1109, %s28, 1
      %p1111 = scmp.lt.s32.totalorder %s29, 0
      %s1112 = scalar_select %p1111, %s29, 0
      %s1113 = sadd.s32 %s1112, %s1110
      %s1114 = smul.addr %s1113, 8
      %s1115 = scalar_lea.vmem %s11, %s1114
      %p1116 = scmp.lt.s32.totalorder %s28, 1
      %s1117 = scalar_select %p1116, %s28, 1
      %p1118 = scmp.lt.s32.totalorder %s29, 0
      %s1119 = scalar_select %p1118, %s29, 0
      %s1120 = smul.addr %s1119, 8
      %s1121 = smul.addr %s1117, 8
      %s1122 = sadd.s32 %s1120, %s1121
      %s1123 = smul.addr %s1122, 8
      %s1124 = scalar_lea.vmem %s12, %s1123
      // Predicated region
      $region57: #{crf_constituency_forward.2} parent=55 // pred_check
        %p1125 = pneg %p259
      $region58: #{crf_constituency_forward.2} parent=55 // pred_check_branch
        %1127 = sbr.rel (%p1125) target = $region60
      $region59: #{crf_constituency_forward.2} parent=55 // pred_region
        _
      $region60: #{crf_constituency_forward.2} parent=55 // pred_fallthru
        _
      // Predicated region
      $region61: #{crf_constituency_forward.2} parent=55 // pred_check
        %p1128 = pneg %p287
      $region62: #{crf_constituency_forward.2} parent=55 // pred_check_branch
        %1130 = sbr.rel (%p1128) target = $region64
      $region63: #{crf_constituency_forward.2} parent=55 // pred_region
        _
      $region64: #{crf_constituency_forward.2} parent=55 // pred_fallthru
        _
      // Predicated region
      $region65: #{crf_constituency_forward.2} parent=55 // pred_check
        %p1131 = pneg %p315
      $region66: #{crf_constituency_forward.2} parent=55 // pred_check_branch
        %1133 = sbr.rel (%p1131) target = $region68
      $region67: #{crf_constituency_forward.2} parent=55 // pred_region
        _
      $region68: #{crf_constituency_forward.2} parent=55 // pred_fallthru
        _
      // Predicated region
      $region69: #{crf_constituency_forward.2} parent=55 // pred_check
        %p1134 = pneg %p343
      $region70: #{crf_constituency_forward.2} parent=55 // pred_check_branch
        %1136 = sbr.rel (%p1134) target = $region72
      $region71: #{crf_constituency_forward.2} parent=55 // pred_region
        _
      $region72: #{crf_constituency_forward.2} parent=55 // pred_fallthru
        _
    $region56: #{crf_constituency_forward.2} parent=5 // pred_fallthru
      _
    %p1137 = scmp.le.s32.totalorder 2, %s19
    // Predicated region
    $region73: #{crf_constituency_forward.2} parent=5 // pred_check
      %p1138 = pneg %p1137
    $region74: #{crf_constituency_forward.2} parent=5 // pred_check_branch
      %1140 = sbr.rel (%p1138) target = $region76
    $region75: #{crf_constituency_forward.2} parent=5 // pred_region
      %s1141 = ssub.s32 %s19, 2
      // Predicated region
      $region77: #{crf_constituency_forward.2} parent=75 // pred_check
        %p1142 = pneg %p265
      $region78: #{crf_constituency_forward.2} parent=75 // pred_check_branch
        %1144 = sbr.rel (%p1142) target = $region80
      $region79: #{crf_constituency_forward.2} parent=75 // pred_region
        %p1145 = scmp.lt.s32.totalorder %s30, 1
        %s1146 = scalar_select %p1145, %s30, 1
        %p1147 = scmp.lt.s32.totalorder %s31, 0
        %s1148 = scalar_select %p1147, %s31, 0
        %s1149 = sadd.s32 %s1148, %s1146
        %s1150 = smul.addr %s1149, 8
        %s1151 = scalar_lea.vmem %s9, %s1150
      $region80: #{crf_constituency_forward.2} parent=75 // pred_fallthru
        _
      // Predicated region
      $region81: #{crf_constituency_forward.2} parent=75 // pred_check
        %p1152 = pneg %p293
      $region82: #{crf_constituency_forward.2} parent=75 // pred_check_branch
        %1154 = sbr.rel (%p1152) target = $region84
      $region83: #{crf_constituency_forward.2} parent=75 // pred_region
        %p1155 = scmp.lt.s32.totalorder %s30, 1
        %s1156 = scalar_select %p1155, %s30, 1
        %p1157 = scmp.lt.s32.totalorder %s31, 0
        %s1158 = scalar_select %p1157, %s31, 0
        %s1159 = sadd.s32 %s1158, %s1156
        %s1160 = smul.addr %s1159, 8
        %s1161 = scalar_lea.vmem %s10, %s1160
      $region84: #{crf_constituency_forward.2} parent=75 // pred_fallthru
        _
      // Predicated region
      $region85: #{crf_constituency_forward.2} parent=75 // pred_check
        %p1162 = pneg %p321
      $region86: #{crf_constituency_forward.2} parent=75 // pred_check_branch
        %1164 = sbr.rel (%p1162) target = $region88
      $region87: #{crf_constituency_forward.2} parent=75 // pred_region
        %p1165 = scmp.lt.s32.totalorder %s30, 1
        %s1166 = scalar_select %p1165, %s30, 1
        %p1167 = scmp.lt.s32.totalorder %s31, 0
        %s1168 = scalar_select %p1167, %s31, 0
        %s1169 = sadd.s32 %s1168, %s1166
        %s1170 = smul.addr %s1169, 8
        %s1171 = scalar_lea.vmem %s11, %s1170
      $region88: #{crf_constituency_forward.2} parent=75 // pred_fallthru
        _
      // Predicated region
      $region89: #{crf_constituency_forward.2} parent=75 // pred_check
        %p1172 = pneg %p349
      $region90: #{crf_constituency_forward.2} parent=75 // pred_check_branch
        %1174 = sbr.rel (%p1172) target = $region92
      $region91: #{crf_constituency_forward.2} parent=75 // pred_region
        %p1175 = scmp.lt.s32.totalorder %s30, 1
        %s1176 = scalar_select %p1175, %s30, 1
        %p1177 = scmp.lt.s32.totalorder %s31, 0
        %s1178 = scalar_select %p1177, %s31, 0
        %s1179 = smul.addr %s1178, 8
        %s1180 = smul.addr %s1176, 8
        %s1181 = sadd.s32 %s1179, %s1180
        %s1182 = smul.addr %s1181, 8
        %s1183 = scalar_lea.vmem %s12, %s1182
      $region92: #{crf_constituency_forward.2} parent=75 // pred_fallthru
        _
    $region76: #{crf_constituency_forward.2} parent=5 // pred_fallthru
      _
  $region6: #{crf_constituency_forward.2} parent=0 // loop_footer
    %s23 = sadd.s32 1, %s19
  $region7: #{crf_constituency_forward.2} parent=0 // loop_footer_branch
    %18 = sbr.rel target = $region3
  $region8: #{crf_constituency_forward.2} parent=0 // loop_exit
    _

</llo_original>
